<compile_context>
chip_gen: v5e
topology: v5e:2x2
jax: 0.10.0
libtpu: 0.0.40
codegen_flags: <defaults>
</compile_context>

<pallas_src>
import jax
import jax.numpy as jnp
import numpy as np
from jax.experimental import pallas as pl
from jax.experimental.pallas import tpu as pltpu

EPS = 1e-5  # PyTorch GroupNorm default


def _round_up(x, m):
    return ((x + m - 1) // m) * m


def _gm_scaled(C, G, L):
    """(C, C) group-membership matrix pre-scaled by 1 / (pixels * group_size)."""
    gid = np.arange(C) // (C // G)
    gm = (gid[:, None] == gid[None, :]).astype(np.float32) / float(L * (C // G))
    return jnp.asarray(gm)


# --------------------------------------------------------------------------
# Fused Pallas kernel (one batch element per grid step)
# --------------------------------------------------------------------------
def _make_kernel(W, L, M0):
    """W = image width, L = H*W, M0 = 128-aligned write offset inside scratch."""

    def gn_relu(y, gm, gamma, beta):
        # y: (C, L) f32, all lanes valid.  gm: (C, C) membership / count.
        s = jnp.sum(y, axis=1, keepdims=True)                   # (C, 1)
        ss = jnp.sum(y * y, axis=1, keepdims=True)              # (C, 1)
        stats = jnp.concatenate([s, ss], axis=1)                # (C, 2)
        g = jnp.dot(gm, stats, preferred_element_type=jnp.float32)
        mean, msq = g[:, 0:1], g[:, 1:2]
        var = jnp.maximum(msq - mean * mean, 0.0)               # guard cancellation
        a = jax.lax.rsqrt(var + EPS) * gamma                    # folded affine
        b = beta - mean * a
        return jnp.maximum(y * a + b, 0.0)

    def kernel(x_ref, cmask_ref,
               w1_ref, b1_ref, g1_ref, be1_ref,
               w2_ref, b2_ref, g2_ref, be2_ref,
               w3_ref, b3_ref, g3_ref, be3_ref,
               gm1_ref, gm3_ref, o_ref, ypad_ref):
        x = x_ref[0]                                            # (Cin, L) f32

        # ---- stage 1: 1x1 conv -> GN -> ReLU (compact layout) -------------
        y1 = jnp.dot(w1_ref[...], x.astype(w1_ref.dtype),
                     preferred_element_type=jnp.float32) + b1_ref[...]
        y1 = gn_relu(y1, gm1_ref[...], g1_ref[...], be1_ref[...])

        # ---- stage 2: 3x3 conv as ONE stacked-K matmul ---------------------
        # Margin-padded copy of y1; zero margins provide the vertical halo.
        ypad_ref[...] = jnp.zeros_like(ypad_ref)
        ypad_ref[:, M0:M0 + L] = y1.astype(ypad_ref.dtype)      # lane-aligned store

        left = cmask_ref[0:1, :]                                # 0 where w == 0
        right = cmask_ref[1:2, :]                               # 0 where w == W-1
        taps = []
        for kh in range(3):
            for kw in range(3):
                d = (kh - 1) * W + (kw - 1)
                t = ypad_ref[:, M0 + d:M0 + d + L]              # static shifted view
                if kw == 0:
                    t = t * left                                # mask row wrap-around
                elif kw == 2:
                    t = t * right
                taps.append(t)
        S = jnp.concatenate(taps, axis=0)                       # (9*p4, L)
        y2 = jnp.dot(w2_ref[...], S,
                     preferred_element_type=jnp.float32) + b2_ref[...]
        y2 = gn_relu(y2, gm1_ref[...], g2_ref[...], be2_ref[...])

        # ---- stage 3: 1x1 conv -> GN -> ReLU -> (+residual) -> ReLU --------
        y3 = jnp.dot(w3_ref[...], y2.astype(w3_ref.dtype),
                     preferred_element_type=jnp.float32) + b3_ref[...]
        y3 = gn_relu(y3, gm3_ref[...], g3_ref[...], be3_ref[...])

        o_ref[0] = jnp.maximum(x + y3, 0.0)                     # residual in f32

    return kernel


# --------------------------------------------------------------------------
# Host-side glue
# --------------------------------------------------------------------------
def bottleneck_forward(x_nchw, params, *, matmul_dtype=jnp.float32):
    """x_nchw: (N, in_planes, H, W) f32 -> (N, planes, H, W) f32 (NCHW).

    matmul_dtype=bf16 only affects MXU operands (residual / GN stats stay f32);
    it only pays off for p4 >= 16 and should stay f32 on v5e for small planes.
    """
    N, Cin, H, W = x_nchw.shape
    p4 = params["w1"].shape[0]
    planes = params["w3"].shape[0]
    G = planes // 8
    assert Cin == planes, "stride=1 path requires in_planes == planes"

    L = H * W
    M0 = _round_up(W + 1, 128)                # lane-aligned offset, >= conv halo
    Wtot = _round_up(M0 + L + W + 1, 128)     # scratch width incl. right halo

    xf = x_nchw.reshape(N, Cin, L)            # free reshape; stays f32 in HBM

    # column-validity masks for the kw=0 / kw=2 taps (left / right image edge)
    w_idx = np.arange(L) % W
    cmask = np.stack([w_idx != 0, w_idx != W - 1]).astype(np.float32)
    cmask = jnp.asarray(cmask).astype(matmul_dtype)                       # (2, L)

    col = lambda v: jnp.asarray(v, jnp.float32).reshape(-1, 1)            # (C, 1)

    w1 = params["w1"][:, :, 0, 0].astype(matmul_dtype)                    # (p4, Cin)
    # stacked-K conv weights: [o, (kh*3+kw)*p4 + c] = w2[o, c, kh, kw]
    w2 = jnp.transpose(params["w2"], (0, 2, 3, 1)).reshape(p4, 9 * p4)
    w2 = w2.astype(matmul_dtype)                                          # (p4, 9*p4)
    w3 = params["w3"][:, :, 0, 0].astype(matmul_dtype)                    # (planes, p4)

    gm1 = _gm_scaled(p4, G, L)                                            # (p4, p4)
    gm3 = _gm_scaled(planes, G, L)                                        # (pl, pl)

    kernel = _make_kernel(W, L, M0)

    def full(shape):
        return pl.BlockSpec(shape, lambda *_: (0,) * len(shape))

    in_specs = [
        pl.BlockSpec((1, Cin, L), lambda n: (n, 0, 0)),                   # x
        full((2, L)),                                                     # col masks
        full((p4, Cin)), full((p4, 1)), full((p4, 1)), full((p4, 1)),     # stage 1
        full((p4, 9 * p4)), full((p4, 1)), full((p4, 1)), full((p4, 1)),  # stage 2
        full((planes, p4)), full((planes, 1)),                            # stage 3
        full((planes, 1)), full((planes, 1)),
        full((p4, p4)), full((planes, planes)),                           # group mats
    ]

    out = pl.pallas_call(
        kernel,
        out_shape=jax.ShapeDtypeStruct((N, planes, L), jnp.float32),
        grid=(N,),
        in_specs=in_specs,
        out_specs=pl.BlockSpec((1, planes, L), lambda n: (n, 0, 0)),
        scratch_shapes=[pltpu.VMEM((p4, Wtot), matmul_dtype)],
        compiler_params=pltpu.CompilerParams(
            dimension_semantics=("parallel",),
            vmem_limit_bytes=64 * 1024 * 1024),
    )(xf, cmask,
      w1, col(params["b1"]), col(params["g1"]), col(params["be1"]),
      w2, col(params["b2"]), col(params["g2"]), col(params["be2"]),
      w3, col(params["b3"]), col(params["g3"]), col(params["be3"]),
      gm1, gm3)

    # free reshape (split of last dim) -> NCHW, matching PyTorch
    return out.reshape(N, planes, H, W)


# --------------------------------------------------------------------------
# Parameters & pure-JAX reference (NCHW, matches the PyTorch module)
# --------------------------------------------------------------------------
def init_params(key, in_planes, planes):
    p4 = planes // 4
    k1, k2, k3 = jax.random.split(key, 3)
    s = 0.1
    lin = lambda n, a: a * jnp.linspace(-1.0, 1.0, n, dtype=jnp.float32)
    return {
        "w1": jax.random.normal(k1, (p4, in_planes, 1, 1), jnp.float32) * s,
        "b1": lin(p4, 0.05), "g1": 1.0 + lin(p4, 0.1), "be1": lin(p4, 0.05),
        "w2": jax.random.normal(k2, (p4, p4, 3, 3), jnp.float32) * s,
        "b2": lin(p4, 0.05), "g2": 1.0 + lin(p4, 0.1), "be2": lin(p4, 0.05),
        "w3": jax.random.normal(k3, (planes, p4, 1, 1), jnp.float32) * s,
        "b3": lin(planes, 0.05), "g3": 1.0 + lin(planes, 0.1),
        "be3": lin(planes, 0.05),
    }


def reference_forward(x, params):
    planes = params["w3"].shape[0]
    G = planes // 8

    def conv1x1(z, w, b):
        return jnp.einsum("nchw,oc->nohw", z, w[:, :, 0, 0]) + b[None, :, None, None]

    def conv3x3(z, w, b):
        N, C, H, W = z.shape
        zp = jnp.pad(z, ((0, 0), (0, 0), (1, 1), (1, 1)))
        out = 0.0
        for i in range(3):
            for j in range(3):
                out = out + jnp.einsum("nchw,oc->nohw",
                                       zp[:, :, i:i + H, j:j + W], w[:, :, i, j])
        return out + b[None, :, None, None]

    def gn(z, gamma, beta):
        N, C, H, W = z.shape
        zg = z.reshape(N, G, C // G, H, W)
        mean = zg.mean(axis=(2, 3, 4), keepdims=True)
        var = ((zg - mean) ** 2).mean(axis=(2, 3, 4), keepdims=True)
        zn = ((zg - mean) / jnp.sqrt(var + EPS)).reshape(N, C, H, W)
        return zn * gamma[None, :, None, None] + beta[None, :, None, None]

    relu = lambda v: jnp.maximum(v, 0.0)
    y = relu(gn(conv1x1(x, params["w1"], params["b1"]), params["g1"], params["be1"]))
    y = relu(gn(conv3x3(y, params["w2"], params["b2"]), params["g2"], params["be2"]))
    y = relu(gn(conv1x1(y, params["w3"], params["b3"]), params["g3"], params["be3"]))
    return relu(x + y)


# --------------------------------------------------------------------------
if __name__ == "__main__":
    key = jax.random.PRNGKey(0)
    kx, kp = jax.random.split(key)

    N, H, W = 2, 8, 8
    in_planes = planes = 32     # stride=1 path: residual needs in_planes == planes

    x = jax.random.normal(kx, (N, in_planes, H, W), jnp.float32)   # NCHW
    params = init_params(kp, in_planes, planes)

    out = jax.block_until_ready(jax.jit(bottleneck_forward)(x, params))
    ref = reference_forward(x, params)
    np.testing.assert_allclose(np.asarray(out), np.asarray(ref),
                               rtol=1e-3, atol=1e-3)
    print("KERNEL_OK")
</pallas_src>

<mosaic_0001>
module attributes {stable_mosaic.version = 11 : i64} {
  func.func @kernel(%arg0: i32, %arg1: memref<1x32x64xf32, #tpu.memory_space<vmem>>, %arg2: memref<2x64xf32, #tpu.memory_space<vmem>>, %arg3: memref<8x32xf32, #tpu.memory_space<vmem>>, %arg4: memref<8x1xf32, #tpu.memory_space<vmem>>, %arg5: memref<8x1xf32, #tpu.memory_space<vmem>>, %arg6: memref<8x1xf32, #tpu.memory_space<vmem>>, %arg7: memref<8x72xf32, #tpu.memory_space<vmem>>, %arg8: memref<8x1xf32, #tpu.memory_space<vmem>>, %arg9: memref<8x1xf32, #tpu.memory_space<vmem>>, %arg10: memref<8x1xf32, #tpu.memory_space<vmem>>, %arg11: memref<32x8xf32, #tpu.memory_space<vmem>>, %arg12: memref<32x1xf32, #tpu.memory_space<vmem>>, %arg13: memref<32x1xf32, #tpu.memory_space<vmem>>, %arg14: memref<32x1xf32, #tpu.memory_space<vmem>>, %arg15: memref<8x8xf32, #tpu.memory_space<vmem>>, %arg16: memref<32x32xf32, #tpu.memory_space<vmem>>, %arg17: memref<1x32x64xf32, #tpu.memory_space<vmem>>, %arg18: memref<8x256xf32, #tpu.memory_space<vmem>>) attributes {dimension_semantics = [#tpu.dimension_semantics<parallel>], iteration_bounds = array<i64: 2>, scalar_prefetch = 0 : i64, scratch_operands = 1 : i64, tpu.core_type = #tpu.core_type<tc>, window_params = [{transform_indices = @transform_0, window_bounds = array<i64: 1, 32, 64>}, {pipeline_mode = #tpu.pipeline_mode<synchronous>, transform_indices = @transform_1, window_bounds = array<i64: 2, 64>}, {pipeline_mode = #tpu.pipeline_mode<synchronous>, transform_indices = @transform_2, window_bounds = array<i64: 8, 32>}, {pipeline_mode = #tpu.pipeline_mode<synchronous>, transform_indices = @transform_3, window_bounds = array<i64: 8, 1>}, {pipeline_mode = #tpu.pipeline_mode<synchronous>, transform_indices = @transform_4, window_bounds = array<i64: 8, 1>}, {pipeline_mode = #tpu.pipeline_mode<synchronous>, transform_indices = @transform_5, window_bounds = array<i64: 8, 1>}, {pipeline_mode = #tpu.pipeline_mode<synchronous>, transform_indices = @transform_6, window_bounds = array<i64: 8, 72>}, {pipeline_mode = #tpu.pipeline_mode<synchronous>, transform_indices = @transform_7, window_bounds = array<i64: 8, 1>}, {pipeline_mode = #tpu.pipeline_mode<synchronous>, transform_indices = @transform_8, window_bounds = array<i64: 8, 1>}, {pipeline_mode = #tpu.pipeline_mode<synchronous>, transform_indices = @transform_9, window_bounds = array<i64: 8, 1>}, {pipeline_mode = #tpu.pipeline_mode<synchronous>, transform_indices = @transform_10, window_bounds = array<i64: 32, 8>}, {pipeline_mode = #tpu.pipeline_mode<synchronous>, transform_indices = @transform_11, window_bounds = array<i64: 32, 1>}, {pipeline_mode = #tpu.pipeline_mode<synchronous>, transform_indices = @transform_12, window_bounds = array<i64: 32, 1>}, {pipeline_mode = #tpu.pipeline_mode<synchronous>, transform_indices = @transform_13, window_bounds = array<i64: 32, 1>}, {pipeline_mode = #tpu.pipeline_mode<synchronous>, transform_indices = @transform_14, window_bounds = array<i64: 8, 8>}, {pipeline_mode = #tpu.pipeline_mode<synchronous>, transform_indices = @transform_15, window_bounds = array<i64: 32, 32>}, {transform_indices = @transform_16, window_bounds = array<i64: 1, 32, 64>}]} {
    %c0 = arith.constant 0 : index
    %c0_0 = arith.constant 0 : index
    %c0_1 = arith.constant 0 : index
    %0 = vector.load %arg1[%c0, %c0_0, %c0_1] : memref<1x32x64xf32, #tpu.memory_space<vmem>>, vector<1x32x64xf32>
    %1 = vector.shape_cast %0 : vector<1x32x64xf32> to vector<32x64xf32>
    %c0_2 = arith.constant 0 : index
    %c0_3 = arith.constant 0 : index
    %2 = vector.load %arg3[%c0_2, %c0_3] : memref<8x32xf32, #tpu.memory_space<vmem>>, vector<8x32xf32>
    %cst = arith.constant dense<0.000000e+00> : vector<8x64xf32>
    %3 = tpu.matmul %2, %1, %cst {dimension_numbers = #tpu.dot_dimension_numbers<[1], [0], [0], [1], [0, 0, 1, 1], [], []>} : vector<8x32xf32>, vector<32x64xf32>, vector<8x64xf32> -> vector<8x64xf32>
    %c0_4 = arith.constant 0 : index
    %c0_5 = arith.constant 0 : index
    %4 = vector.load %arg4[%c0_4, %c0_5] : memref<8x1xf32, #tpu.memory_space<vmem>>, vector<8x1xf32>
    %5 = vector.broadcast %4 : vector<8x1xf32> to vector<8x64xf32>
    %6 = arith.addf %3, %5 : vector<8x64xf32>
    %c0_6 = arith.constant 0 : index
    %c0_7 = arith.constant 0 : index
    %7 = vector.load %arg15[%c0_6, %c0_7] : memref<8x8xf32, #tpu.memory_space<vmem>>, vector<8x8xf32>
    %c0_8 = arith.constant 0 : index
    %c0_9 = arith.constant 0 : index
    %8 = vector.load %arg5[%c0_8, %c0_9] : memref<8x1xf32, #tpu.memory_space<vmem>>, vector<8x1xf32>
    %c0_10 = arith.constant 0 : index
    %c0_11 = arith.constant 0 : index
    %9 = vector.load %arg6[%c0_10, %c0_11] : memref<8x1xf32, #tpu.memory_space<vmem>>, vector<8x1xf32>
    %cst_12 = arith.constant dense<0.000000e+00> : vector<8xf32>
    %10 = vector.multi_reduction <add>, %6, %cst_12 [1] : vector<8x64xf32> to vector<8xf32>
    %11 = vector.shape_cast %10 : vector<8xf32> to vector<8x1xf32>
    %12 = arith.mulf %6, %6 : vector<8x64xf32>
    %cst_13 = arith.constant dense<0.000000e+00> : vector<8xf32>
    %13 = vector.multi_reduction <add>, %12, %cst_13 [1] : vector<8x64xf32> to vector<8xf32>
    %14 = vector.shape_cast %13 : vector<8xf32> to vector<8x1xf32>
    %15 = tpu.concatenate %11, %14 in 1 : vector<8x1xf32>, vector<8x1xf32> -> vector<8x2xf32>
    %cst_14 = arith.constant dense<0.000000e+00> : vector<8x2xf32>
    %16 = tpu.matmul %7, %15, %cst_14 {dimension_numbers = #tpu.dot_dimension_numbers<[1], [0], [0], [1], [0, 0, 1, 1], [], []>} : vector<8x8xf32>, vector<8x2xf32>, vector<8x2xf32> -> vector<8x2xf32>
    %17 = vector.extract_strided_slice %16 {offsets = [0, 0], sizes = [8, 1], strides = [1, 1]} : vector<8x2xf32> to vector<8x1xf32>
    %18 = vector.extract_strided_slice %16 {offsets = [0, 1], sizes = [8, 1], strides = [1, 1]} : vector<8x2xf32> to vector<8x1xf32>
    %19 = arith.mulf %17, %17 : vector<8x1xf32>
    %20 = arith.subf %18, %19 : vector<8x1xf32>
    %cst_15 = arith.constant 0.000000e+00 : f32
    %21 = vector.broadcast %cst_15 : f32 to vector<8x1xf32>
    %22 = arith.maximumf %20, %21 : vector<8x1xf32>
    %cst_16 = arith.constant 9.99999974E-6 : f32
    %23 = vector.broadcast %cst_16 : f32 to vector<8x1xf32>
    %24 = arith.addf %22, %23 : vector<8x1xf32>
    %25 = math.rsqrt %24 : vector<8x1xf32>
    %26 = arith.mulf %25, %8 : vector<8x1xf32>
    %27 = arith.mulf %17, %26 : vector<8x1xf32>
    %28 = arith.subf %9, %27 : vector<8x1xf32>
    %29 = vector.broadcast %26 : vector<8x1xf32> to vector<8x64xf32>
    %30 = arith.mulf %6, %29 : vector<8x64xf32>
    %31 = vector.broadcast %28 : vector<8x1xf32> to vector<8x64xf32>
    %32 = arith.addf %30, %31 : vector<8x64xf32>
    %cst_17 = arith.constant 0.000000e+00 : f32
    %33 = vector.broadcast %cst_17 : f32 to vector<8x64xf32>
    %34 = arith.maximumf %32, %33 : vector<8x64xf32>
    %cst_18 = arith.constant 0.000000e+00 : f32
    %35 = vector.broadcast %cst_18 : f32 to vector<8x256xf32>
    %c0_19 = arith.constant 0 : index
    %c0_20 = arith.constant 0 : index
    %36 = vector.load %arg18[%c0_19, %c0_20] : memref<8x256xf32, #tpu.memory_space<vmem>>, vector<8x256xf32>
    tpu.vector_store %arg18[%c0_19, %c0_20], %35 {strides = array<i32>} : memref<8x256xf32, #tpu.memory_space<vmem>>, vector<8x256xf32>,
    %c0_21 = arith.constant 0 : index
    %c128 = arith.constant 128 : index
    %37 = vector.load %arg18[%c0_21, %c128] : memref<8x256xf32, #tpu.memory_space<vmem>>, vector<8x64xf32>
    tpu.vector_store %arg18[%c0_21, %c128], %34 {strides = array<i32>} : memref<8x256xf32, #tpu.memory_space<vmem>>, vector<8x64xf32>,
    %c0_22 = arith.constant 0 : index
    %c0_23 = arith.constant 0 : index
    %38 = vector.load %arg2[%c0_22, %c0_23] : memref<2x64xf32, #tpu.memory_space<vmem>>, vector<1x64xf32>
    %c1 = arith.constant 1 : index
    %c0_24 = arith.constant 0 : index
    %39 = vector.load %arg2[%c1, %c0_24] : memref<2x64xf32, #tpu.memory_space<vmem>>, vector<1x64xf32>
    %c0_25 = arith.constant 0 : index
    %c119 = arith.constant 119 : index
    %40 = vector.load %arg18[%c0_25, %c119] : memref<8x256xf32, #tpu.memory_space<vmem>>, vector<8x64xf32>
    %41 = vector.broadcast %38 : vector<1x64xf32> to vector<8x64xf32>
    %42 = arith.mulf %40, %41 : vector<8x64xf32>
    %c0_26 = arith.constant 0 : index
    %c120 = arith.constant 120 : index
    %43 = vector.load %arg18[%c0_26, %c120] : memref<8x256xf32, #tpu.memory_space<vmem>>, vector<8x64xf32>
    %c0_27 = arith.constant 0 : index
    %c121 = arith.constant 121 : index
    %44 = vector.load %arg18[%c0_27, %c121] : memref<8x256xf32, #tpu.memory_space<vmem>>, vector<8x64xf32>
    %45 = vector.broadcast %39 : vector<1x64xf32> to vector<8x64xf32>
    %46 = arith.mulf %44, %45 : vector<8x64xf32>
    %c0_28 = arith.constant 0 : index
    %c127 = arith.constant 127 : index
    %47 = vector.load %arg18[%c0_28, %c127] : memref<8x256xf32, #tpu.memory_space<vmem>>, vector<8x64xf32>
    %48 = vector.broadcast %38 : vector<1x64xf32> to vector<8x64xf32>
    %49 = arith.mulf %47, %48 : vector<8x64xf32>
    %c0_29 = arith.constant 0 : index
    %c128_30 = arith.constant 128 : index
    %50 = vector.load %arg18[%c0_29, %c128_30] : memref<8x256xf32, #tpu.memory_space<vmem>>, vector<8x64xf32>
    %c0_31 = arith.constant 0 : index
    %c129 = arith.constant 129 : index
    %51 = vector.load %arg18[%c0_31, %c129] : memref<8x256xf32, #tpu.memory_space<vmem>>, vector<8x64xf32>
    %52 = vector.broadcast %39 : vector<1x64xf32> to vector<8x64xf32>
    %53 = arith.mulf %51, %52 : vector<8x64xf32>
    %c0_32 = arith.constant 0 : index
    %c135 = arith.constant 135 : index
    %54 = vector.load %arg18[%c0_32, %c135] : memref<8x256xf32, #tpu.memory_space<vmem>>, vector<8x64xf32>
    %55 = vector.broadcast %38 : vector<1x64xf32> to vector<8x64xf32>
    %56 = arith.mulf %54, %55 : vector<8x64xf32>
    %c0_33 = arith.constant 0 : index
    %c136 = arith.constant 136 : index
    %57 = vector.load %arg18[%c0_33, %c136] : memref<8x256xf32, #tpu.memory_space<vmem>>, vector<8x64xf32>
    %c0_34 = arith.constant 0 : index
    %c137 = arith.constant 137 : index
    %58 = vector.load %arg18[%c0_34, %c137] : memref<8x256xf32, #tpu.memory_space<vmem>>, vector<8x64xf32>
    %59 = vector.broadcast %39 : vector<1x64xf32> to vector<8x64xf32>
    %60 = arith.mulf %58, %59 : vector<8x64xf32>
    %61 = tpu.concatenate %42, %43, %46, %49, %50, %53, %56, %57, %60 in 0 : vector<8x64xf32>, vector<8x64xf32>, vector<8x64xf32>, vector<8x64xf32>, vector<8x64xf32>, vector<8x64xf32>, vector<8x64xf32>, vector<8x64xf32>, vector<8x64xf32> -> vector<72x64xf32>
    %c0_35 = arith.constant 0 : index
    %c0_36 = arith.constant 0 : index
    %62 = vector.load %arg7[%c0_35, %c0_36] : memref<8x72xf32, #tpu.memory_space<vmem>>, vector<8x72xf32>
    %cst_37 = arith.constant dense<0.000000e+00> : vector<8x64xf32>
    %63 = tpu.matmul %62, %61, %cst_37 {dimension_numbers = #tpu.dot_dimension_numbers<[1], [0], [0], [1], [0, 0, 1, 1], [], []>} : vector<8x72xf32>, vector<72x64xf32>, vector<8x64xf32> -> vector<8x64xf32>
    %c0_38 = arith.constant 0 : index
    %c0_39 = arith.constant 0 : index
    %64 = vector.load %arg8[%c0_38, %c0_39] : memref<8x1xf32, #tpu.memory_space<vmem>>, vector<8x1xf32>
    %65 = vector.broadcast %64 : vector<8x1xf32> to vector<8x64xf32>
    %66 = arith.addf %63, %65 : vector<8x64xf32>
    %c0_40 = arith.constant 0 : index
    %c0_41 = arith.constant 0 : index
    %67 = vector.load %arg15[%c0_40, %c0_41] : memref<8x8xf32, #tpu.memory_space<vmem>>, vector<8x8xf32>
    %c0_42 = arith.constant 0 : index
    %c0_43 = arith.constant 0 : index
    %68 = vector.load %arg9[%c0_42, %c0_43] : memref<8x1xf32, #tpu.memory_space<vmem>>, vector<8x1xf32>
    %c0_44 = arith.constant 0 : index
    %c0_45 = arith.constant 0 : index
    %69 = vector.load %arg10[%c0_44, %c0_45] : memref<8x1xf32, #tpu.memory_space<vmem>>, vector<8x1xf32>
    %cst_46 = arith.constant dense<0.000000e+00> : vector<8xf32>
    %70 = vector.multi_reduction <add>, %66, %cst_46 [1] : vector<8x64xf32> to vector<8xf32>
    %71 = vector.shape_cast %70 : vector<8xf32> to vector<8x1xf32>
    %72 = arith.mulf %66, %66 : vector<8x64xf32>
    %cst_47 = arith.constant dense<0.000000e+00> : vector<8xf32>
    %73 = vector.multi_reduction <add>, %72, %cst_47 [1] : vector<8x64xf32> to vector<8xf32>
    %74 = vector.shape_cast %73 : vector<8xf32> to vector<8x1xf32>
    %75 = tpu.concatenate %71, %74 in 1 : vector<8x1xf32>, vector<8x1xf32> -> vector<8x2xf32>
    %cst_48 = arith.constant dense<0.000000e+00> : vector<8x2xf32>
    %76 = tpu.matmul %67, %75, %cst_48 {dimension_numbers = #tpu.dot_dimension_numbers<[1], [0], [0], [1], [0, 0, 1, 1], [], []>} : vector<8x8xf32>, vector<8x2xf32>, vector<8x2xf32> -> vector<8x2xf32>
    %77 = vector.extract_strided_slice %76 {offsets = [0, 0], sizes = [8, 1], strides = [1, 1]} : vector<8x2xf32> to vector<8x1xf32>
    %78 = vector.extract_strided_slice %76 {offsets = [0, 1], sizes = [8, 1], strides = [1, 1]} : vector<8x2xf32> to vector<8x1xf32>
    %79 = arith.mulf %77, %77 : vector<8x1xf32>
    %80 = arith.subf %78, %79 : vector<8x1xf32>
    %cst_49 = arith.constant 0.000000e+00 : f32
    %81 = vector.broadcast %cst_49 : f32 to vector<8x1xf32>
    %82 = arith.maximumf %80, %81 : vector<8x1xf32>
    %cst_50 = arith.constant 9.99999974E-6 : f32
    %83 = vector.broadcast %cst_50 : f32 to vector<8x1xf32>
    %84 = arith.addf %82, %83 : vector<8x1xf32>
    %85 = math.rsqrt %84 : vector<8x1xf32>
    %86 = arith.mulf %85, %68 : vector<8x1xf32>
    %87 = arith.mulf %77, %86 : vector<8x1xf32>
    %88 = arith.subf %69, %87 : vector<8x1xf32>
    %89 = vector.broadcast %86 : vector<8x1xf32> to vector<8x64xf32>
    %90 = arith.mulf %66, %89 : vector<8x64xf32>
    %91 = vector.broadcast %88 : vector<8x1xf32> to vector<8x64xf32>
    %92 = arith.addf %90, %91 : vector<8x64xf32>
    %cst_51 = arith.constant 0.000000e+00 : f32
    %93 = vector.broadcast %cst_51 : f32 to vector<8x64xf32>
    %94 = arith.maximumf %92, %93 : vector<8x64xf32>
    %c0_52 = arith.constant 0 : index
    %c0_53 = arith.constant 0 : index
    %95 = vector.load %arg11[%c0_52, %c0_53] : memref<32x8xf32, #tpu.memory_space<vmem>>, vector<32x8xf32>
    %cst_54 = arith.constant dense<0.000000e+00> : vector<32x64xf32>
    %96 = tpu.matmul %95, %94, %cst_54 {dimension_numbers = #tpu.dot_dimension_numbers<[1], [0], [0], [1], [0, 0, 1, 1], [], []>} : vector<32x8xf32>, vector<8x64xf32>, vector<32x64xf32> -> vector<32x64xf32>
    %c0_55 = arith.constant 0 : index
    %c0_56 = arith.constant 0 : index
    %97 = vector.load %arg12[%c0_55, %c0_56] : memref<32x1xf32, #tpu.memory_space<vmem>>, vector<32x1xf32>
    %98 = vector.broadcast %97 : vector<32x1xf32> to vector<32x64xf32>
    %99 = arith.addf %96, %98 : vector<32x64xf32>
    %c0_57 = arith.constant 0 : index
    %c0_58 = arith.constant 0 : index
    %100 = vector.load %arg16[%c0_57, %c0_58] : memref<32x32xf32, #tpu.memory_space<vmem>>, vector<32x32xf32>
    %c0_59 = arith.constant 0 : index
    %c0_60 = arith.constant 0 : index
    %101 = vector.load %arg13[%c0_59, %c0_60] : memref<32x1xf32, #tpu.memory_space<vmem>>, vector<32x1xf32>
    %c0_61 = arith.constant 0 : index
    %c0_62 = arith.constant 0 : index
    %102 = vector.load %arg14[%c0_61, %c0_62] : memref<32x1xf32, #tpu.memory_space<vmem>>, vector<32x1xf32>
    %cst_63 = arith.constant dense<0.000000e+00> : vector<32xf32>
    %103 = vector.multi_reduction <add>, %99, %cst_63 [1] : vector<32x64xf32> to vector<32xf32>
    %104 = vector.shape_cast %103 : vector<32xf32> to vector<32x1xf32>
    %105 = arith.mulf %99, %99 : vector<32x64xf32>
    %cst_64 = arith.constant dense<0.000000e+00> : vector<32xf32>
    %106 = vector.multi_reduction <add>, %105, %cst_64 [1] : vector<32x64xf32> to vector<32xf32>
    %107 = vector.shape_cast %106 : vector<32xf32> to vector<32x1xf32>
    %108 = tpu.concatenate %104, %107 in 1 : vector<32x1xf32>, vector<32x1xf32> -> vector<32x2xf32>
    %cst_65 = arith.constant dense<0.000000e+00> : vector<32x2xf32>
    %109 = tpu.matmul %100, %108, %cst_65 {dimension_numbers = #tpu.dot_dimension_numbers<[1], [0], [0], [1], [0, 0, 1, 1], [], []>} : vector<32x32xf32>, vector<32x2xf32>, vector<32x2xf32> -> vector<32x2xf32>
    %110 = vector.extract_strided_slice %109 {offsets = [0, 0], sizes = [32, 1], strides = [1, 1]} : vector<32x2xf32> to vector<32x1xf32>
    %111 = vector.extract_strided_slice %109 {offsets = [0, 1], sizes = [32, 1], strides = [1, 1]} : vector<32x2xf32> to vector<32x1xf32>
    %112 = arith.mulf %110, %110 : vector<32x1xf32>
    %113 = arith.subf %111, %112 : vector<32x1xf32>
    %cst_66 = arith.constant 0.000000e+00 : f32
    %114 = vector.broadcast %cst_66 : f32 to vector<32x1xf32>
    %115 = arith.maximumf %113, %114 : vector<32x1xf32>
    %cst_67 = arith.constant 9.99999974E-6 : f32
    %116 = vector.broadcast %cst_67 : f32 to vector<32x1xf32>
    %117 = arith.addf %115, %116 : vector<32x1xf32>
    %118 = math.rsqrt %117 : vector<32x1xf32>
    %119 = arith.mulf %118, %101 : vector<32x1xf32>
    %120 = arith.mulf %110, %119 : vector<32x1xf32>
    %121 = arith.subf %102, %120 : vector<32x1xf32>
    %122 = vector.broadcast %119 : vector<32x1xf32> to vector<32x64xf32>
    %123 = arith.mulf %99, %122 : vector<32x64xf32>
    %124 = vector.broadcast %121 : vector<32x1xf32> to vector<32x64xf32>
    %125 = arith.addf %123, %124 : vector<32x64xf32>
    %cst_68 = arith.constant 0.000000e+00 : f32
    %126 = vector.broadcast %cst_68 : f32 to vector<32x64xf32>
    %127 = arith.maximumf %125, %126 : vector<32x64xf32>
    %128 = arith.addf %1, %127 : vector<32x64xf32>
    %cst_69 = arith.constant 0.000000e+00 : f32
    %129 = vector.broadcast %cst_69 : f32 to vector<32x64xf32>
    %130 = arith.maximumf %128, %129 : vector<32x64xf32>
    %c0_70 = arith.constant 0 : index
    %c0_71 = arith.constant 0 : index
    %c0_72 = arith.constant 0 : index
    %131 = vector.load %arg17[%c0_70, %c0_71, %c0_72] : memref<1x32x64xf32, #tpu.memory_space<vmem>>, vector<1x32x64xf32>
    %132 = vector.shape_cast %131 : vector<1x32x64xf32> to vector<32x64xf32>
    %133 = vector.shape_cast %130 : vector<32x64xf32> to vector<1x32x64xf32>
    tpu.vector_store %arg17[%c0_70, %c0_71, %c0_72], %133 {strides = array<i32>} : memref<1x32x64xf32, #tpu.memory_space<vmem>>, vector<1x32x64xf32>,
    return
  }
  func.func @transform_0(%arg0: i32) -> (i32, i32, i32) {
    %c0_i32 = arith.constant 0 : i32
    %c0_i32_0 = arith.constant 0 : i32
    %c0_i32_1 = arith.constant 0 : i32
    return %arg0, %c0_i32, %c0_i32_0 : i32, i32, i32
  }
  func.func @transform_1(%arg0: i32) -> (i32, i32) {
    %c0_i32 = arith.constant 0 : i32
    %c0_i32_0 = arith.constant 0 : i32
    %c0_i32_1 = arith.constant 0 : i32
    return %c0_i32, %c0_i32_0 : i32, i32
  }
  func.func @transform_2(%arg0: i32) -> (i32, i32) {
    %c0_i32 = arith.constant 0 : i32
    %c0_i32_0 = arith.constant 0 : i32
    %c0_i32_1 = arith.constant 0 : i32
    return %c0_i32, %c0_i32_0 : i32, i32
  }
  func.func @transform_3(%arg0: i32) -> (i32, i32) {
    %c0_i32 = arith.constant 0 : i32
    %c0_i32_0 = arith.constant 0 : i32
    %c0_i32_1 = arith.constant 0 : i32
    return %c0_i32, %c0_i32_0 : i32, i32
  }
  func.func @transform_4(%arg0: i32) -> (i32, i32) {
    %c0_i32 = arith.constant 0 : i32
    %c0_i32_0 = arith.constant 0 : i32
    %c0_i32_1 = arith.constant 0 : i32
    return %c0_i32, %c0_i32_0 : i32, i32
  }
  func.func @transform_5(%arg0: i32) -> (i32, i32) {
    %c0_i32 = arith.constant 0 : i32
    %c0_i32_0 = arith.constant 0 : i32
    %c0_i32_1 = arith.constant 0 : i32
    return %c0_i32, %c0_i32_0 : i32, i32
  }
  func.func @transform_6(%arg0: i32) -> (i32, i32) {
    %c0_i32 = arith.constant 0 : i32
    %c0_i32_0 = arith.constant 0 : i32
    %c0_i32_1 = arith.constant 0 : i32
    return %c0_i32, %c0_i32_0 : i32, i32
  }
  func.func @transform_7(%arg0: i32) -> (i32, i32) {
    %c0_i32 = arith.constant 0 : i32
    %c0_i32_0 = arith.constant 0 : i32
    %c0_i32_1 = arith.constant 0 : i32
    return %c0_i32, %c0_i32_0 : i32, i32
  }
  func.func @transform_8(%arg0: i32) -> (i32, i32) {
    %c0_i32 = arith.constant 0 : i32
    %c0_i32_0 = arith.constant 0 : i32
    %c0_i32_1 = arith.constant 0 : i32
    return %c0_i32, %c0_i32_0 : i32, i32
  }
  func.func @transform_9(%arg0: i32) -> (i32, i32) {
    %c0_i32 = arith.constant 0 : i32
    %c0_i32_0 = arith.constant 0 : i32
    %c0_i32_1 = arith.constant 0 : i32
    return %c0_i32, %c0_i32_0 : i32, i32
  }
  func.func @transform_10(%arg0: i32) -> (i32, i32) {
    %c0_i32 = arith.constant 0 : i32
    %c0_i32_0 = arith.constant 0 : i32
    %c0_i32_1 = arith.constant 0 : i32
    return %c0_i32, %c0_i32_0 : i32, i32
  }
  func.func @transform_11(%arg0: i32) -> (i32, i32) {
    %c0_i32 = arith.constant 0 : i32
    %c0_i32_0 = arith.constant 0 : i32
    %c0_i32_1 = arith.constant 0 : i32
    return %c0_i32, %c0_i32_0 : i32, i32
  }
  func.func @transform_12(%arg0: i32) -> (i32, i32) {
    %c0_i32 = arith.constant 0 : i32
    %c0_i32_0 = arith.constant 0 : i32
    %c0_i32_1 = arith.constant 0 : i32
    return %c0_i32, %c0_i32_0 : i32, i32
  }
  func.func @transform_13(%arg0: i32) -> (i32, i32) {
    %c0_i32 = arith.constant 0 : i32
    %c0_i32_0 = arith.constant 0 : i32
    %c0_i32_1 = arith.constant 0 : i32
    return %c0_i32, %c0_i32_0 : i32, i32
  }
  func.func @transform_14(%arg0: i32) -> (i32, i32) {
    %c0_i32 = arith.constant 0 : i32
    %c0_i32_0 = arith.constant 0 : i32
    %c0_i32_1 = arith.constant 0 : i32
    return %c0_i32, %c0_i32_0 : i32, i32
  }
  func.func @transform_15(%arg0: i32) -> (i32, i32) {
    %c0_i32 = arith.constant 0 : i32
    %c0_i32_0 = arith.constant 0 : i32
    %c0_i32_1 = arith.constant 0 : i32
    return %c0_i32, %c0_i32_0 : i32, i32
  }
  func.func @transform_16(%arg0: i32) -> (i32, i32, i32) {
    %c0_i32 = arith.constant 0 : i32
    %c0_i32_0 = arith.constant 0 : i32
    %c0_i32_1 = arith.constant 0 : i32
    return %arg0, %c0_i32, %c0_i32_0 : i32, i32, i32
  }
}

</mosaic_0001>

<llo_original>
// kernel: bottleneck_forward.1
$region0: #{bottleneck_forward.1}
  #allocation0 [shape = 'u32[]', space=smem, size = 0x4, offset = 0x4, fixed_abs, tag = 'smem constant byte address 0x4 - core index']
  #allocation1 [shape = 'u32[72,128]{1,0:T(1,128)}', space=vmem, size = 0x9000, scoped, tag = 'internal scratch']
  #allocation2 [shape = 'f32[8,256]{1,0:T(8,128)}', space=vmem, size = 0x2000, scoped, tag = 'scratch operand']
  %s0 = inlined_call_operand.vmem [shape: f32[2,32,64], index: 0, kind: input, shape index: {}]
  %s1 = inlined_call_operand.vmem [shape: f32[2,64], index: 1, kind: input, shape index: {}]
  %s2 = inlined_call_operand.vmem [shape: f32[8,32], index: 2, kind: input, shape index: {}]
  %s3 = inlined_call_operand.vmem [shape: f32[8,1], index: 3, kind: input, shape index: {}]
  %s4 = inlined_call_operand.vmem [shape: f32[8,1], index: 4, kind: input, shape index: {}]
  %s5 = inlined_call_operand.vmem [shape: f32[8,1], index: 5, kind: input, shape index: {}]
  %s6 = inlined_call_operand.vmem [shape: f32[8,72], index: 6, kind: input, shape index: {}]
  %s7 = inlined_call_operand.vmem [shape: f32[8,1], index: 7, kind: input, shape index: {}]
  %s8 = inlined_call_operand.vmem [shape: f32[8,1], index: 8, kind: input, shape index: {}]
  %s9 = inlined_call_operand.vmem [shape: f32[8,1], index: 9, kind: input, shape index: {}]
  %s10 = inlined_call_operand.vmem [shape: f32[32,8], index: 10, kind: input, shape index: {}]
  %s11 = inlined_call_operand.vmem [shape: f32[32,1], index: 11, kind: input, shape index: {}]
  %s12 = inlined_call_operand.vmem [shape: f32[32,1], index: 12, kind: input, shape index: {}]
  %s13 = inlined_call_operand.vmem [shape: f32[32,1], index: 13, kind: input, shape index: {}]
  %s14 = inlined_call_operand.vmem [shape: f32[8,8], index: 14, kind: input, shape index: {}]
  %s15 = inlined_call_operand.vmem [shape: f32[32,32], index: 15, kind: input, shape index: {}]
  %s16 = inlined_call_operand.vmem [shape: f32[2,32,64], index: 16, kind: output, shape index: {}]
  %s17 = sld [smem:[#allocation0]]
  $region97: #{bottleneck_forward.1} parent=0
    _
  %s19 = ssub.s32 1, %s17
  %s20 = scalar_select 0, %s19, %s17
  loop: start=0, step=1, limit=4
  $region2: #{bottleneck_forward.1} parent=0 // loop_pre_header
    _
  $region3: #{bottleneck_forward.1} parent=0 // loop_header
    %s22 = sphi 0, %s26
    %p23 = scmp.ge.s32.totalorder %s22, 4
    %s32 = sphi 0, %s34
    %s35 = sphi 0, %s32
    %s36 = sphi 0, %s35
    %s52 = sphi 0, %s36
    %s56 = sphi 0, %s56
    %s58 = sphi 0, %s56
    %s59 = sphi 0, %s58
    %s73 = sphi 0, %s59
    %s77 = sphi 0, %s77
    %s79 = sphi 0, %s77
    %s80 = sphi 0, %s79
    %s94 = sphi 0, %s80
    %s98 = sphi 0, %s98
    %s100 = sphi 0, %s98
    %s101 = sphi 0, %s100
    %s115 = sphi 0, %s101
    %s119 = sphi 0, %s119
    %s121 = sphi 0, %s119
    %s122 = sphi 0, %s121
    %s136 = sphi 0, %s122
    %s140 = sphi 0, %s140
    %s142 = sphi 0, %s140
    %s143 = sphi 0, %s142
    %s157 = sphi 0, %s143
    %s161 = sphi 0, %s161
    %s163 = sphi 0, %s161
    %s164 = sphi 0, %s163
    %s178 = sphi 0, %s164
    %s182 = sphi 0, %s182
    %s184 = sphi 0, %s182
    %s185 = sphi 0, %s184
    %s199 = sphi 0, %s185
    %s203 = sphi 0, %s203
    %s205 = sphi 0, %s203
    %s206 = sphi 0, %s205
    %s220 = sphi 0, %s206
    %s224 = sphi 0, %s224
    %s226 = sphi 0, %s224
    %s227 = sphi 0, %s226
    %s241 = sphi 0, %s227
    %s245 = sphi 0, %s245
    %s247 = sphi 0, %s245
    %s248 = sphi 0, %s247
    %s262 = sphi 0, %s248
    %s266 = sphi 0, %s266
    %s268 = sphi 0, %s266
    %s269 = sphi 0, %s268
    %s283 = sphi 0, %s269
    %s287 = sphi 0, %s287
    %s289 = sphi 0, %s287
    %s290 = sphi 0, %s289
    %s304 = sphi 0, %s290
    %s308 = sphi 0, %s308
    %s310 = sphi 0, %s308
    %s311 = sphi 0, %s310
    %s325 = sphi 0, %s311
    %s329 = sphi 0, %s329
    %s331 = sphi 0, %s329
    %s332 = sphi 0, %s331
    %s346 = sphi 0, %s332
    %s350 = sphi 0, %s350
    %s352 = sphi 0, %s350
    %s353 = sphi 0, %s352
    %s367 = sphi 0, %s353
    %s373 = sphi 0, %s375
    %s376 = sphi 0, %s373
    %s377 = sphi 0, %s376
    %s393 = sphi 0, %s377
  $region4: #{bottleneck_forward.1} parent=0 // loop_header_branch
    %25 = sbr.rel (%p23) target = $region8
  $region5: #{bottleneck_forward.1} parent=0 // loop_body
    %s27 = ssub.s32 %s22, 1
    %s28 = ssub.s32 %s22, 2
    %s29 = sadd.s32 %s22, 1
    %s30 = ssub.s32 %s22, %s29
    %p31 = scmp.eq.s32.totalorder %s30, 0
    %s33 = sadd.s32 %s32, 1
    %s34 = scalar_select %p31, %s32, %s33
    %p37 = pneg %p31
    %p38 = scmp.eq.s32.totalorder %s22, 1
    %p39 = por %p37, %p38
    %p40 = scmp.ne.s32.totalorder %s32, %s35
    %p41 = scmp.eq.s32.totalorder %s22, 0
    %p42 = por %p40, %p41
    %p43 = scmp.ne.s32.totalorder %s32, %s35
    %p44 = scmp.eq.s32.totalorder %s27, 1
    %p45 = por %p43, %p44
    %p46 = scmp.ne.s32.totalorder %s35, %s36
    %p47 = scmp.eq.s32.totalorder %s27, 0
    %p48 = por %p46, %p47
    %p49 = scmp.ne.s32.totalorder %s35, %s36
    %p50 = scmp.eq.s32.totalorder %s28, 1
    %p51 = por %p49, %p50
    %p53 = scmp.ne.s32.totalorder %s36, %s52
    %p54 = scmp.eq.s32.totalorder %s28, 0
    %p55 = por %p53, %p54
    %s57 = sadd.s32 %s56, 1
    %p60 = scmp.eq.s32.totalorder %s22, 1
    %p61 = scmp.ne.s32.totalorder %s56, %s58
    %p62 = scmp.eq.s32.totalorder %s22, 0
    %p63 = por %p61, %p62
    %p64 = scmp.ne.s32.totalorder %s56, %s58
    %p65 = scmp.eq.s32.totalorder %s27, 1
    %p66 = por %p64, %p65
    %p67 = scmp.ne.s32.totalorder %s58, %s59
    %p68 = scmp.eq.s32.totalorder %s27, 0
    %p69 = por %p67, %p68
    %p70 = scmp.ne.s32.totalorder %s58, %s59
    %p71 = scmp.eq.s32.totalorder %s28, 1
    %p72 = por %p70, %p71
    %p74 = scmp.ne.s32.totalorder %s59, %s73
    %p75 = scmp.eq.s32.totalorder %s28, 0
    %p76 = por %p74, %p75
    %s78 = sadd.s32 %s77, 1
    %p81 = scmp.eq.s32.totalorder %s22, 1
    %p82 = scmp.ne.s32.totalorder %s77, %s79
    %p83 = scmp.eq.s32.totalorder %s22, 0
    %p84 = por %p82, %p83
    %p85 = scmp.ne.s32.totalorder %s77, %s79
    %p86 = scmp.eq.s32.totalorder %s27, 1
    %p87 = por %p85, %p86
    %p88 = scmp.ne.s32.totalorder %s79, %s80
    %p89 = scmp.eq.s32.totalorder %s27, 0
    %p90 = por %p88, %p89
    %p91 = scmp.ne.s32.totalorder %s79, %s80
    %p92 = scmp.eq.s32.totalorder %s28, 1
    %p93 = por %p91, %p92
    %p95 = scmp.ne.s32.totalorder %s80, %s94
    %p96 = scmp.eq.s32.totalorder %s28, 0
    %p97 = por %p95, %p96
    %s99 = sadd.s32 %s98, 1
    %p102 = scmp.eq.s32.totalorder %s22, 1
    %p103 = scmp.ne.s32.totalorder %s98, %s100
    %p104 = scmp.eq.s32.totalorder %s22, 0
    %p105 = por %p103, %p104
    %p106 = scmp.ne.s32.totalorder %s98, %s100
    %p107 = scmp.eq.s32.totalorder %s27, 1
    %p108 = por %p106, %p107
    %p109 = scmp.ne.s32.totalorder %s100, %s101
    %p110 = scmp.eq.s32.totalorder %s27, 0
    %p111 = por %p109, %p110
    %p112 = scmp.ne.s32.totalorder %s100, %s101
    %p113 = scmp.eq.s32.totalorder %s28, 1
    %p114 = por %p112, %p113
    %p116 = scmp.ne.s32.totalorder %s101, %s115
    %p117 = scmp.eq.s32.totalorder %s28, 0
    %p118 = por %p116, %p117
    %s120 = sadd.s32 %s119, 1
    %p123 = scmp.eq.s32.totalorder %s22, 1
    %p124 = scmp.ne.s32.totalorder %s119, %s121
    %p125 = scmp.eq.s32.totalorder %s22, 0
    %p126 = por %p124, %p125
    %p127 = scmp.ne.s32.totalorder %s119, %s121
    %p128 = scmp.eq.s32.totalorder %s27, 1
    %p129 = por %p127, %p128
    %p130 = scmp.ne.s32.totalorder %s121, %s122
    %p131 = scmp.eq.s32.totalorder %s27, 0
    %p132 = por %p130, %p131
    %p133 = scmp.ne.s32.totalorder %s121, %s122
    %p134 = scmp.eq.s32.totalorder %s28, 1
    %p135 = por %p133, %p134
    %p137 = scmp.ne.s32.totalorder %s122, %s136
    %p138 = scmp.eq.s32.totalorder %s28, 0
    %p139 = por %p137, %p138
    %s141 = sadd.s32 %s140, 1
    %p144 = scmp.eq.s32.totalorder %s22, 1
    %p145 = scmp.ne.s32.totalorder %s140, %s142
    %p146 = scmp.eq.s32.totalorder %s22, 0
    %p147 = por %p145, %p146
    %p148 = scmp.ne.s32.totalorder %s140, %s142
    %p149 = scmp.eq.s32.totalorder %s27, 1
    %p150 = por %p148, %p149
    %p151 = scmp.ne.s32.totalorder %s142, %s143
    %p152 = scmp.eq.s32.totalorder %s27, 0
    %p153 = por %p151, %p152
    %p154 = scmp.ne.s32.totalorder %s142, %s143
    %p155 = scmp.eq.s32.totalorder %s28, 1
    %p156 = por %p154, %p155
    %p158 = scmp.ne.s32.totalorder %s143, %s157
    %p159 = scmp.eq.s32.totalorder %s28, 0
    %p160 = por %p158, %p159
    %s162 = sadd.s32 %s161, 1
    %p165 = scmp.eq.s32.totalorder %s22, 1
    %p166 = scmp.ne.s32.totalorder %s161, %s163
    %p167 = scmp.eq.s32.totalorder %s22, 0
    %p168 = por %p166, %p167
    %p169 = scmp.ne.s32.totalorder %s161, %s163
    %p170 = scmp.eq.s32.totalorder %s27, 1
    %p171 = por %p169, %p170
    %p172 = scmp.ne.s32.totalorder %s163, %s164
    %p173 = scmp.eq.s32.totalorder %s27, 0
    %p174 = por %p172, %p173
    %p175 = scmp.ne.s32.totalorder %s163, %s164
    %p176 = scmp.eq.s32.totalorder %s28, 1
    %p177 = por %p175, %p176
    %p179 = scmp.ne.s32.totalorder %s164, %s178
    %p180 = scmp.eq.s32.totalorder %s28, 0
    %p181 = por %p179, %p180
    %s183 = sadd.s32 %s182, 1
    %p186 = scmp.eq.s32.totalorder %s22, 1
    %p187 = scmp.ne.s32.totalorder %s182, %s184
    %p188 = scmp.eq.s32.totalorder %s22, 0
    %p189 = por %p187, %p188
    %p190 = scmp.ne.s32.totalorder %s182, %s184
    %p191 = scmp.eq.s32.totalorder %s27, 1
    %p192 = por %p190, %p191
    %p193 = scmp.ne.s32.totalorder %s184, %s185
    %p194 = scmp.eq.s32.totalorder %s27, 0
    %p195 = por %p193, %p194
    %p196 = scmp.ne.s32.totalorder %s184, %s185
    %p197 = scmp.eq.s32.totalorder %s28, 1
    %p198 = por %p196, %p197
    %p200 = scmp.ne.s32.totalorder %s185, %s199
    %p201 = scmp.eq.s32.totalorder %s28, 0
    %p202 = por %p200, %p201
    %s204 = sadd.s32 %s203, 1
    %p207 = scmp.eq.s32.totalorder %s22, 1
    %p208 = scmp.ne.s32.totalorder %s203, %s205
    %p209 = scmp.eq.s32.totalorder %s22, 0
    %p210 = por %p208, %p209
    %p211 = scmp.ne.s32.totalorder %s203, %s205
    %p212 = scmp.eq.s32.totalorder %s27, 1
    %p213 = por %p211, %p212
    %p214 = scmp.ne.s32.totalorder %s205, %s206
    %p215 = scmp.eq.s32.totalorder %s27, 0
    %p216 = por %p214, %p215
    %p217 = scmp.ne.s32.totalorder %s205, %s206
    %p218 = scmp.eq.s32.totalorder %s28, 1
    %p219 = por %p217, %p218
    %p221 = scmp.ne.s32.totalorder %s206, %s220
    %p222 = scmp.eq.s32.totalorder %s28, 0
    %p223 = por %p221, %p222
    %s225 = sadd.s32 %s224, 1
    %p228 = scmp.eq.s32.totalorder %s22, 1
    %p229 = scmp.ne.s32.totalorder %s224, %s226
    %p230 = scmp.eq.s32.totalorder %s22, 0
    %p231 = por %p229, %p230
    %p232 = scmp.ne.s32.totalorder %s224, %s226
    %p233 = scmp.eq.s32.totalorder %s27, 1
    %p234 = por %p232, %p233
    %p235 = scmp.ne.s32.totalorder %s226, %s227
    %p236 = scmp.eq.s32.totalorder %s27, 0
    %p237 = por %p235, %p236
    %p238 = scmp.ne.s32.totalorder %s226, %s227
    %p239 = scmp.eq.s32.totalorder %s28, 1
    %p240 = por %p238, %p239
    %p242 = scmp.ne.s32.totalorder %s227, %s241
    %p243 = scmp.eq.s32.totalorder %s28, 0
    %p244 = por %p242, %p243
    %s246 = sadd.s32 %s245, 1
    %p249 = scmp.eq.s32.totalorder %s22, 1
    %p250 = scmp.ne.s32.totalorder %s245, %s247
    %p251 = scmp.eq.s32.totalorder %s22, 0
    %p252 = por %p250, %p251
    %p253 = scmp.ne.s32.totalorder %s245, %s247
    %p254 = scmp.eq.s32.totalorder %s27, 1
    %p255 = por %p253, %p254
    %p256 = scmp.ne.s32.totalorder %s247, %s248
    %p257 = scmp.eq.s32.totalorder %s27, 0
    %p258 = por %p256, %p257
    %p259 = scmp.ne.s32.totalorder %s247, %s248
    %p260 = scmp.eq.s32.totalorder %s28, 1
    %p261 = por %p259, %p260
    %p263 = scmp.ne.s32.totalorder %s248, %s262
    %p264 = scmp.eq.s32.totalorder %s28, 0
    %p265 = por %p263, %p264
    %s267 = sadd.s32 %s266, 1
    %p270 = scmp.eq.s32.totalorder %s22, 1
    %p271 = scmp.ne.s32.totalorder %s266, %s268
    %p272 = scmp.eq.s32.totalorder %s22, 0
    %p273 = por %p271, %p272
    %p274 = scmp.ne.s32.totalorder %s266, %s268
    %p275 = scmp.eq.s32.totalorder %s27, 1
    %p276 = por %p274, %p275
    %p277 = scmp.ne.s32.totalorder %s268, %s269
    %p278 = scmp.eq.s32.totalorder %s27, 0
    %p279 = por %p277, %p278
    %p280 = scmp.ne.s32.totalorder %s268, %s269
    %p281 = scmp.eq.s32.totalorder %s28, 1
    %p282 = por %p280, %p281
    %p284 = scmp.ne.s32.totalorder %s269, %s283
    %p285 = scmp.eq.s32.totalorder %s28, 0
    %p286 = por %p284, %p285
    %s288 = sadd.s32 %s287, 1
    %p291 = scmp.eq.s32.totalorder %s22, 1
    %p292 = scmp.ne.s32.totalorder %s287, %s289
    %p293 = scmp.eq.s32.totalorder %s22, 0
    %p294 = por %p292, %p293
    %p295 = scmp.ne.s32.totalorder %s287, %s289
    %p296 = scmp.eq.s32.totalorder %s27, 1
    %p297 = por %p295, %p296
    %p298 = scmp.ne.s32.totalorder %s289, %s290
    %p299 = scmp.eq.s32.totalorder %s27, 0
    %p300 = por %p298, %p299
    %p301 = scmp.ne.s32.totalorder %s289, %s290
    %p302 = scmp.eq.s32.totalorder %s28, 1
    %p303 = por %p301, %p302
    %p305 = scmp.ne.s32.totalorder %s290, %s304
    %p306 = scmp.eq.s32.totalorder %s28, 0
    %p307 = por %p305, %p306
    %s309 = sadd.s32 %s308, 1
    %p312 = scmp.eq.s32.totalorder %s22, 1
    %p313 = scmp.ne.s32.totalorder %s308, %s310
    %p314 = scmp.eq.s32.totalorder %s22, 0
    %p315 = por %p313, %p314
    %p316 = scmp.ne.s32.totalorder %s308, %s310
    %p317 = scmp.eq.s32.totalorder %s27, 1
    %p318 = por %p316, %p317
    %p319 = scmp.ne.s32.totalorder %s310, %s311
    %p320 = scmp.eq.s32.totalorder %s27, 0
    %p321 = por %p319, %p320
    %p322 = scmp.ne.s32.totalorder %s310, %s311
    %p323 = scmp.eq.s32.totalorder %s28, 1
    %p324 = por %p322, %p323
    %p326 = scmp.ne.s32.totalorder %s311, %s325
    %p327 = scmp.eq.s32.totalorder %s28, 0
    %p328 = por %p326, %p327
    %s330 = sadd.s32 %s329, 1
    %p333 = scmp.eq.s32.totalorder %s22, 1
    %p334 = scmp.ne.s32.totalorder %s329, %s331
    %p335 = scmp.eq.s32.totalorder %s22, 0
    %p336 = por %p334, %p335
    %p337 = scmp.ne.s32.totalorder %s329, %s331
    %p338 = scmp.eq.s32.totalorder %s27, 1
    %p339 = por %p337, %p338
    %p340 = scmp.ne.s32.totalorder %s331, %s332
    %p341 = scmp.eq.s32.totalorder %s27, 0
    %p342 = por %p340, %p341
    %p343 = scmp.ne.s32.totalorder %s331, %s332
    %p344 = scmp.eq.s32.totalorder %s28, 1
    %p345 = por %p343, %p344
    %p347 = scmp.ne.s32.totalorder %s332, %s346
    %p348 = scmp.eq.s32.totalorder %s28, 0
    %p349 = por %p347, %p348
    %s351 = sadd.s32 %s350, 1
    %p354 = scmp.eq.s32.totalorder %s22, 1
    %p355 = scmp.ne.s32.totalorder %s350, %s352
    %p356 = scmp.eq.s32.totalorder %s22, 0
    %p357 = por %p355, %p356
    %p358 = scmp.ne.s32.totalorder %s350, %s352
    %p359 = scmp.eq.s32.totalorder %s27, 1
    %p360 = por %p358, %p359
    %p361 = scmp.ne.s32.totalorder %s352, %s353
    %p362 = scmp.eq.s32.totalorder %s27, 0
    %p363 = por %p361, %p362
    %p364 = scmp.ne.s32.totalorder %s352, %s353
    %p365 = scmp.eq.s32.totalorder %s28, 1
    %p366 = por %p364, %p365
    %p368 = scmp.ne.s32.totalorder %s353, %s367
    %p369 = scmp.eq.s32.totalorder %s28, 0
    %p370 = por %p368, %p369
    %s371 = ssub.s32 %s22, %s29
    %p372 = scmp.eq.s32.totalorder %s371, 0
    %s374 = sadd.s32 %s373, 1
    %s375 = scalar_select %p372, %s373, %s374
    %p378 = pneg %p372
    %p379 = scmp.eq.s32.totalorder %s22, 1
    %p380 = por %p378, %p379
    %p381 = scmp.ne.s32.totalorder %s373, %s376
    %p382 = scmp.eq.s32.totalorder %s22, 0
    %p383 = por %p381, %p382
    %p384 = scmp.ne.s32.totalorder %s373, %s376
    %p385 = scmp.eq.s32.totalorder %s27, 1
    %p386 = por %p384, %p385
    %p387 = scmp.ne.s32.totalorder %s376, %s377
    %p388 = scmp.eq.s32.totalorder %s27, 0
    %p389 = por %p387, %p388
    %p390 = scmp.ne.s32.totalorder %s376, %s377
    %p391 = scmp.eq.s32.totalorder %s28, 1
    %p392 = por %p390, %p391
    %p394 = scmp.ne.s32.totalorder %s377, %s393
    %p395 = scmp.eq.s32.totalorder %s28, 0
    %p396 = por %p394, %p395
    %p397 = scmp.le.s32.totalorder 1, %s22
    %p398 = scmp.lt.s32.totalorder %s22, 3
    %p399 = pnand %p397, %p398
    %p400 = pneg %p399
    // Predicated region
    $region9: #{bottleneck_forward.1} parent=5 // pred_check
      _
    $region10: #{bottleneck_forward.1} parent=5 // pred_check_branch
      %402 = sbr.rel (%p399) target = $region12
    $region11: #{bottleneck_forward.1} parent=5 // pred_region
      %s403 = ssub.s32 %s22, 1
      // Predicated region
      $region13: #{bottleneck_forward.1} parent=11 // pred_check
        %p404 = pneg %p69
      $region14: #{bottleneck_forward.1} parent=11 // pred_check_branch
        %406 = sbr.rel (%p404) target = $region16
      $region15: #{bottleneck_forward.1} parent=11 // pred_region
        _
      $region16: #{bottleneck_forward.1} parent=11 // pred_fallthru
        _
      // Predicated region
      $region17: #{bottleneck_forward.1} parent=11 // pred_check
        %p407 = pneg %p90
      $region18: #{bottleneck_forward.1} parent=11 // pred_check_branch
        %409 = sbr.rel (%p407) target = $region20
      $region19: #{bottleneck_forward.1} parent=11 // pred_region
        _
      $region20: #{bottleneck_forward.1} parent=11 // pred_fallthru
        _
      // Predicated region
      $region21: #{bottleneck_forward.1} parent=11 // pred_check
        %p410 = pneg %p111
      $region22: #{bottleneck_forward.1} parent=11 // pred_check_branch
        %412 = sbr.rel (%p410) target = $region24
      $region23: #{bottleneck_forward.1} parent=11 // pred_region
        _
      $region24: #{bottleneck_forward.1} parent=11 // pred_fallthru
        _
      // Predicated region
      $region25: #{bottleneck_forward.1} parent=11 // pred_check
        %p413 = pneg %p132
      $region26: #{bottleneck_forward.1} parent=11 // pred_check_branch
        %415 = sbr.rel (%p413) target = $region28
      $region27: #{bottleneck_forward.1} parent=11 // pred_region
        _
      $region28: #{bottleneck_forward.1} parent=11 // pred_fallthru
        _
      // Predicated region
      $region29: #{bottleneck_forward.1} parent=11 // pred_check
        %p416 = pneg %p153
      $region30: #{bottleneck_forward.1} parent=11 // pred_check_branch
        %418 = sbr.rel (%p416) target = $region32
      $region31: #{bottleneck_forward.1} parent=11 // pred_region
        _
      $region32: #{bottleneck_forward.1} parent=11 // pred_fallthru
        _
      // Predicated region
      $region33: #{bottleneck_forward.1} parent=11 // pred_check
        %p419 = pneg %p174
      $region34: #{bottleneck_forward.1} parent=11 // pred_check_branch
        %421 = sbr.rel (%p419) target = $region36
      $region35: #{bottleneck_forward.1} parent=11 // pred_region
        _
      $region36: #{bottleneck_forward.1} parent=11 // pred_fallthru
        _
      // Predicated region
      $region37: #{bottleneck_forward.1} parent=11 // pred_check
        %p422 = pneg %p195
      $region38: #{bottleneck_forward.1} parent=11 // pred_check_branch
        %424 = sbr.rel (%p422) target = $region40
      $region39: #{bottleneck_forward.1} parent=11 // pred_region
        _
      $region40: #{bottleneck_forward.1} parent=11 // pred_fallthru
        _
      // Predicated region
      $region41: #{bottleneck_forward.1} parent=11 // pred_check
        %p425 = pneg %p216
      $region42: #{bottleneck_forward.1} parent=11 // pred_check_branch
        %427 = sbr.rel (%p425) target = $region44
      $region43: #{bottleneck_forward.1} parent=11 // pred_region
        _
      $region44: #{bottleneck_forward.1} parent=11 // pred_fallthru
        _
      // Predicated region
      $region45: #{bottleneck_forward.1} parent=11 // pred_check
        %p428 = pneg %p237
      $region46: #{bottleneck_forward.1} parent=11 // pred_check_branch
        %430 = sbr.rel (%p428) target = $region48
      $region47: #{bottleneck_forward.1} parent=11 // pred_region
        _
      $region48: #{bottleneck_forward.1} parent=11 // pred_fallthru
        _
      // Predicated region
      $region49: #{bottleneck_forward.1} parent=11 // pred_check
        %p431 = pneg %p258
      $region50: #{bottleneck_forward.1} parent=11 // pred_check_branch
        %433 = sbr.rel (%p431) target = $region52
      $region51: #{bottleneck_forward.1} parent=11 // pred_region
        _
      $region52: #{bottleneck_forward.1} parent=11 // pred_fallthru
        _
      // Predicated region
      $region53: #{bottleneck_forward.1} parent=11 // pred_check
        %p434 = pneg %p279
      $region54: #{bottleneck_forward.1} parent=11 // pred_check_branch
        %436 = sbr.rel (%p434) target = $region56
      $region55: #{bottleneck_forward.1} parent=11 // pred_region
        _
      $region56: #{bottleneck_forward.1} parent=11 // pred_fallthru
        _
      // Predicated region
      $region57: #{bottleneck_forward.1} parent=11 // pred_check
        %p437 = pneg %p300
      $region58: #{bottleneck_forward.1} parent=11 // pred_check_branch
        %439 = sbr.rel (%p437) target = $region60
      $region59: #{bottleneck_forward.1} parent=11 // pred_region
        _
      $region60: #{bottleneck_forward.1} parent=11 // pred_fallthru
        _
      // Predicated region
      $region61: #{bottleneck_forward.1} parent=11 // pred_check
        %p440 = pneg %p321
      $region62: #{bottleneck_forward.1} parent=11 // pred_check_branch
        %442 = sbr.rel (%p440) target = $region64
      $region63: #{bottleneck_forward.1} parent=11 // pred_region
        _
      $region64: #{bottleneck_forward.1} parent=11 // pred_fallthru
        _
      // Predicated region
      $region65: #{bottleneck_forward.1} parent=11 // pred_check
        %p443 = pneg %p342
      $region66: #{bottleneck_forward.1} parent=11 // pred_check_branch
        %445 = sbr.rel (%p443) target = $region68
      $region67: #{bottleneck_forward.1} parent=11 // pred_region
        _
      $region68: #{bottleneck_forward.1} parent=11 // pred_fallthru
        _
      // Predicated region
      $region69: #{bottleneck_forward.1} parent=11 // pred_check
        %p446 = pneg %p363
      $region70: #{bottleneck_forward.1} parent=11 // pred_check_branch
        %448 = sbr.rel (%p446) target = $region72
      $region71: #{bottleneck_forward.1} parent=11 // pred_region
        _
      $region72: #{bottleneck_forward.1} parent=11 // pred_fallthru
        _
    $region12: #{bottleneck_forward.1} parent=5 // pred_fallthru
      _
    %p449 = scmp.lt.s32.totalorder %s22, 2
    // Predicated region
    $region73: #{bottleneck_forward.1} parent=5 // pred_check
      %p450 = pneg %p449
    $region74: #{bottleneck_forward.1} parent=5 // pred_check_branch
      %452 = sbr.rel (%p450) target = $region76
    $region75: #{bottleneck_forward.1} parent=5 // pred_region
      // Predicated region
      $region77: #{bottleneck_forward.1} parent=75 // pred_check
        %p453 = pneg %p42
      $region78: #{bottleneck_forward.1} parent=75 // pred_check_branch
        %455 = sbr.rel (%p453) target = $region80
      $region79: #{bottleneck_forward.1} parent=75 // pred_region
        %p456 = scmp.lt.s32.totalorder %s22, 1
        %s457 = scalar_select %p456, %s22, 1
        %s458 = smul.addr %s457, 4
        %s459 = smul.addr %s458, 8
        %s460 = scalar_lea.vmem %s0, %s459
      $region80: #{bottleneck_forward.1} parent=75 // pred_fallthru
        _
    $region76: #{bottleneck_forward.1} parent=5 // pred_fallthru
      _
    %p461 = scmp.le.s32.totalorder 1, %s22
    %p462 = scmp.lt.s32.totalorder %s22, 3
    %p463 = pnand %p461, %p462
    %p464 = pneg %p463
    // Predicated region
    $region81: #{bottleneck_forward.1} parent=5 // pred_check
      _
    $region82: #{bottleneck_forward.1} parent=5 // pred_check_branch
      %466 = sbr.rel (%p463) target = $region84
    $region83: #{bottleneck_forward.1} parent=5 // pred_region
      %s467 = ssub.s32 %s22, 1
      %p468 = scmp.lt.s32.totalorder %s27, 1
      %s469 = scalar_select %p468, %s27, 1
      %s470 = smul.addr %s469, 4
      %s471 = smul.addr %s470, 8
      %s472 = scalar_lea.vmem %s0, %s471
      %p473 = pneg %p48
      %p474 = pneg %p45
      %p475 = pneg %p69
      %p476 = pneg %p66
      %p477 = pneg %p90
      %p478 = pneg %p87
      %p479 = pneg %p111
      %p480 = pneg %p108
      %p481 = pneg %p132
      %p482 = pneg %p129
      %p483 = pneg %p153
      %p484 = pneg %p150
      %p485 = pneg %p174
      %p486 = pneg %p171
      %p487 = pneg %p195
      %p488 = pneg %p192
      %p489 = pneg %p216
      %p490 = pneg %p213
      %p491 = pneg %p237
      %p492 = pneg %p234
      %p493 = pneg %p258
      %p494 = pneg %p255
      %p495 = pneg %p279
      %p496 = pneg %p276
      %p497 = pneg %p300
      %p498 = pneg %p297
      %p499 = pneg %p321
      %p500 = pneg %p318
      %p501 = pneg %p342
      %p502 = pneg %p339
      %p503 = pneg %p363
      %p504 = pneg %p360
      %p505 = pneg %p389
      %p506 = pneg %p386
      %p507 = scmp.lt.s32.totalorder %s27, 1
      %s508 = scalar_select %p507, %s27, 1
      %s509 = smul.addr %s508, 4
      %s510 = smul.addr %s509, 8
      %s511 = scalar_lea.vmem %s16, %s510
      %p512 = scmp.lt.s32.totalorder %s27, 1
      %s513 = scalar_select %p512, %s27, 1
      %s514 = smul.addr %s513, 4
      %s515 = smul.addr %s514, 8
      %s516 = scalar_lea.vmem %s0, %s515
      %p517 = scmp.lt.s32.totalorder %s27, 1
      %s518 = scalar_select %p517, %s27, 1
      %s519 = smul.addr %s518, 4
      %s520 = smul.addr %s519, 8
      %s521 = scalar_lea.vmem %s16, %s520
      %v522 = vld [vmem:[%s516] sm:$0xff]
      %v523 = vld [vmem:[%s516 + $0x8] sm:$0xff]
      %v524 = vld [vmem:[%s516 + $0x10] sm:$0xff]
      %v525 = vld [vmem:[%s516 + $0x18] sm:$0xff]
      %v526 = vld [vmem:[%s2] sm:$0xff]
      %v527 = vld [vmem:[%s3] sm:$0xff]
      %529 = vset.pattern.permute.xlu0 0
      %530 = vperm.xlu0 %529, %v527
      %v531 = vpop.permute.xlu0 %530
      %vm533 = vcmask 261120
      %v535 = vsel %vm533, %v526, 0
      %537 = vmatpush.msra.mxu0 0.0
      %538 = vmatpush.msra.mxu0 0.0
      %539 = vmatpush.msra.mxu0 0.0
      %540 = vmatpush.msra.mxu0 0.0
      %541 = vmatpush.msra.mxu0 0.0
      %542 = vmatpush.msra.mxu0 0.0
      %543 = vmatpush.msra.mxu0 0.0
      %544 = vmatpush.msra.mxu0 0.0
      %545 = vmatpush.msra.mxu0 0.0
      %546 = vmatpush.msra.mxu0 0.0
      %547 = vmatpush.msra.mxu0 0.0
      %548 = vmatpush.msra.mxu0 0.0
      %549 = vmatpush.msra.mxu0 %v525
      %550 = vmatpush.msra.mxu0 %v524
      %551 = vmatpush.msra.mxu0 %v523
      %552 = vmatpush.msra.mxu0 %v522
      %553 = vmatmul.f32.gmra.mxu0 %v535
      %v554 = vpop.f32.mrf.mxu0
      %v555 = vadd.f32 %v531, %v554
      %556 = vdwg.mxu0
      %v557 = vld [vmem:[%s14] sm:$0xff]
      %v558 = vld [vmem:[%s4] sm:$0xff]
      %v559 = vld [vmem:[%s5] sm:$0xff]
      %vm560 = vcmask 523264
      %v561 = vsel %vm560, %v555, 0.0
      %562 = vadd.xlane.f32.xlu0 %v561
      %v563 = vpop.xlane.xlu0 %562
      %v564 = vmul.f32 %v555, %v555
      %v565 = vsel %vm560, %v564, 0.0
      %566 = vadd.xlane.f32.xlu0 %v565
      %v567 = vpop.xlane.xlu0 %566
      %vm568 = vcmask 7168
      %v569 = vsel %vm568, %v563, %v567
      %vm570 = vcmask 64512
      %v572 = vsel %vm570, %v557, 0
      %574 = vmatpush.msra.mxu0 0.0
      %575 = vmatpush.msra.mxu0 0.0
      %576 = vmatpush.msra.mxu0 0.0
      %577 = vmatpush.msra.mxu0 0.0
      %578 = vmatpush.msra.mxu0 0.0
      %579 = vmatpush.msra.mxu0 0.0
      %580 = vmatpush.msra.mxu0 0.0
      %581 = vmatpush.msra.mxu0 0.0
      %582 = vmatpush.msra.mxu0 0.0
      %583 = vmatpush.msra.mxu0 0.0
      %584 = vmatpush.msra.mxu0 0.0
      %585 = vmatpush.msra.mxu0 0.0
      %586 = vmatpush.msra.mxu0 0.0
      %587 = vmatpush.msra.mxu0 0.0
      %588 = vmatpush.msra.mxu0 0.0
      %589 = vmatpush.msra.mxu0 %v569
      %590 = vmatmul.f32.gmra.mxu0 %v572
      %v591 = vpop.f32.mrf.mxu0
      %v592 = vadd.f32 0.0, %v591
      %593 = vdwg.mxu0
      %v594 = vmul.f32 %v592, %v592
      %596 = vrot.lane.b32.xlu0 %v594, 1
      %v597 = vpop.permute.xlu0 %596
      %v599 = vsub.f32 %v592, %v597
      %v600 = vmax.f32 %v599, 0.0
      %v601 = vadd.f32 %v600, 1e-05
      %v602 = vrsqrt.pop %v601
      %v603 = vmul.f32 %v602, %v601
      %v604 = vmul.f32 %v603, %v602
      %v605 = vmul.f32 0.5, %v604
      %v606 = vsub.f32 1.5, %v605
      %v607 = vmul.f32 %v602, %v606
      %vm608 = vweird.f32 %v601
      %vm609 = vweird.f32 %v602
      %vm610 = vmor %vm608, %vm609
      %v611 = vsel %vm610, %v602, %v607
      %613 = vrot.lane.b32.xlu0 %v558, 1
      %v614 = vpop.permute.xlu0 %613
      %v616 = vmul.f32 %v611, %v614
      %618 = vrot.lane.b32.xlu0 %v616, 127
      %v619 = vpop.permute.xlu0 %618
      %v621 = vmul.f32 %v592, %v619
      %v622 = vsub.f32 %v559, %v621
      %623 = vset.pattern.permute.xlu0 1
      %624 = vperm.xlu0 %623, %v616
      %v625 = vpop.permute.xlu0 %624
      %v627 = vmul.f32 %v555, %v625
      %629 = vset.pattern.permute.xlu0 0
      %630 = vperm.xlu0 %629, %v622
      %v631 = vpop.permute.xlu0 %630
      %v633 = vadd.f32 %v627, %v631
      %v634 = vmax.f32 %v633, 0.0
      %635 = vst [vmem:[#allocation2] sm:$0xff] 0.0
      %636 = vst [vmem:[#allocation2 + $0x8] sm:$0xff] 0.0
      %637 = vst.msk [vmem:[#allocation2 + $0x8] sm:$0xff] %vm560, %v634
      %v638 = vld [vmem:[%s1] sm:$0x1]
      %v639 = vld [vmem:[%s1 + $0x1] sm:$0x1]
      %v640 = vld [vmem:[#allocation2] sm:$0xff]
      %v641 = vld [vmem:[#allocation2 + $0x8] sm:$0xff]
      %v642 = vperm.slane %v638, 0
      %644 = vrot.lane.b32.xlu0 %v642, 119
      %v645 = vpop.permute.xlu0 %644
      %v647 = vmul.f32 %v640, %v645
      %v648 = vmul.f32 %v641, %v645
      %v649 = vperm.slane %v639, 0
      %651 = vrot.lane.b32.xlu0 %v649, 121
      %v652 = vpop.permute.xlu0 %651
      %v654 = vmul.f32 %v640, %v652
      %v655 = vmul.f32 %v641, %v652
      %656 = vrot.lane.b32.xlu0 %v642, 127
      %v657 = vpop.permute.xlu0 %656
      %v659 = vmul.f32 %v640, %v657
      %v660 = vmul.f32 %v641, %v657
      %661 = vrot.lane.b32.xlu0 %v649, 1
      %v662 = vpop.permute.xlu0 %661
      %v664 = vmul.f32 %v641, %v662
      %665 = vrot.lane.b32.xlu0 %v642, 7
      %v666 = vpop.permute.xlu0 %665
      %v668 = vmul.f32 %v641, %v666
      %669 = vrot.lane.b32.xlu0 %v649, 9
      %v670 = vpop.permute.xlu0 %669
      %v672 = vmul.f32 %v641, %v670
      %675 = vrot.lane.b32.xlu0 %v640, 127
      %v676 = vpop.permute.xlu0 %675
      %677 = vrot.lane.b32.xlu0 %v641, 127
      %v678 = vpop.permute.xlu0 %677
      %vm679 = vcmask 1039360
      %v680 = vsel %vm679, %v676, %v678
      %683 = vrot.lane.b32.xlu0 %v654, 126
      %v684 = vpop.permute.xlu0 %683
      %685 = vrot.lane.b32.xlu0 %v655, 126
      %v686 = vpop.permute.xlu0 %685
      %vm687 = vcmask 1031168
      %v688 = vsel %vm687, %v684, %v686
      %691 = vrot.lane.b32.xlu0 %v659, 120
      %v692 = vpop.permute.xlu0 %691
      %693 = vrot.lane.b32.xlu0 %v660, 120
      %v694 = vpop.permute.xlu0 %693
      %vm695 = vcmask 982016
      %v696 = vsel %vm695, %v692, %v694
      %697 = vrot.lane.b32.xlu0 %v641, 119
      %v698 = vpop.permute.xlu0 %697
      %700 = vrot.lane.b32.xlu0 %v664, 118
      %v701 = vpop.permute.xlu0 %700
      %703 = vrot.lane.b32.xlu0 %v668, 112
      %v704 = vpop.permute.xlu0 %703
      %705 = vrot.lane.b32.xlu0 %v641, 111
      %v706 = vpop.permute.xlu0 %705
      %708 = vrot.lane.b32.xlu0 %v672, 110
      %v709 = vpop.permute.xlu0 %708
      %v710 = vld [vmem:[%s6] sm:$0xff]
      %v711 = vld [vmem:[%s7] sm:$0xff]
      %713 = vset.pattern.permute.xlu0 0
      %714 = vperm.xlu0 %713, %v711
      %v715 = vpop.permute.xlu0 %714
      %719 = vrot.lane.b32.xlu0 %v647, 9
      %v720 = vpop.permute.xlu0 %719
      %721 = vrot.lane.b32.xlu0 %v648, 9
      %v722 = vpop.permute.xlu0 %721
      %723 = vrot.lane.b32.xlu0 %v680, 9
      %v724 = vpop.permute.xlu0 %723
      %725 = vrot.lane.b32.xlu0 %v678, 9
      %v726 = vpop.permute.xlu0 %725
      %727 = vrot.lane.b32.xlu0 %v688, 9
      %v728 = vpop.permute.xlu0 %727
      %729 = vrot.lane.b32.xlu0 %v686, 9
      %v730 = vpop.permute.xlu0 %729
      %731 = vrot.lane.b32.xlu0 %v696, 9
      %v732 = vpop.permute.xlu0 %731
      %733 = vrot.lane.b32.xlu0 %v694, 9
      %v734 = vpop.permute.xlu0 %733
      %735 = vrot.lane.b32.xlu0 %v698, 9
      %v736 = vpop.permute.xlu0 %735
      %737 = vrot.lane.b32.xlu0 %v701, 9
      %v738 = vpop.permute.xlu0 %737
      %739 = vrot.lane.b32.xlu0 %v704, 9
      %v740 = vpop.permute.xlu0 %739
      %741 = vrot.lane.b32.xlu0 %v706, 9
      %v742 = vpop.permute.xlu0 %741
      %743 = vrot.lane.b32.xlu0 %v709, 9
      %v744 = vpop.permute.xlu0 %743
      %vm745 = vcmask 72704
      %v746 = vsel %vm745, %v720, %v722
      %v747 = vsel %vm745, %v724, %v726
      %v748 = vsel %vm745, %v728, %v730
      %v749 = vsel %vm745, %v732, %v734
      %vm759 = vcmask 588800
      %v761 = vsel %vm759, %v710, 0
      %763 = vmatpush.msra.mxu0 0.0
      %764 = vmatpush.msra.mxu0 0.0
      %765 = vmatpush.msra.mxu0 0.0
      %766 = vmatpush.msra.mxu0 0.0
      %767 = vmatpush.msra.mxu0 0.0
      %768 = vmatpush.msra.mxu0 0.0
      %769 = vmatpush.msra.mxu0 0.0
      %770 = vmatpush.msra.mxu0 %v744
      %771 = vmatpush.msra.mxu0 %v742
      %772 = vmatpush.msra.mxu0 %v740
      %773 = vmatpush.msra.mxu0 %v738
      %774 = vmatpush.msra.mxu0 %v736
      %775 = vmatpush.msra.mxu0 %v749
      %776 = vmatpush.msra.mxu0 %v748
      %777 = vmatpush.msra.mxu0 %v747
      %778 = vmatpush.msra.mxu0 %v746
      %779 = vmatmul.f32.gmra.mxu0 %v761
      %v780 = vpop.f32.mrf.mxu0
      %v781 = vadd.f32 %v715, %v780
      %782 = vdwg.mxu0
      %v783 = vld [vmem:[%s14] sm:$0xff]
      %v784 = vld [vmem:[%s8] sm:$0xff]
      %v785 = vld [vmem:[%s9] sm:$0xff]
      %v786 = vsel %vm560, %v781, 0.0
      %787 = vadd.xlane.f32.xlu0 %v786
      %v788 = vpop.xlane.xlu0 %787
      %v789 = vmul.f32 %v781, %v781
      %v790 = vsel %vm560, %v789, 0.0
      %791 = vadd.xlane.f32.xlu0 %v790
      %v792 = vpop.xlane.xlu0 %791
      %v793 = vsel %vm568, %v788, %v792
      %v795 = vsel %vm570, %v783, 0
      %797 = vmatpush.msra.mxu0 0.0
      %798 = vmatpush.msra.mxu0 0.0
      %799 = vmatpush.msra.mxu0 0.0
      %800 = vmatpush.msra.mxu0 0.0
      %801 = vmatpush.msra.mxu0 0.0
      %802 = vmatpush.msra.mxu0 0.0
      %803 = vmatpush.msra.mxu0 0.0
      %804 = vmatpush.msra.mxu0 0.0
      %805 = vmatpush.msra.mxu0 0.0
      %806 = vmatpush.msra.mxu0 0.0
      %807 = vmatpush.msra.mxu0 0.0
      %808 = vmatpush.msra.mxu0 0.0
      %809 = vmatpush.msra.mxu0 0.0
      %810 = vmatpush.msra.mxu0 0.0
      %811 = vmatpush.msra.mxu0 0.0
      %812 = vmatpush.msra.mxu0 %v793
      %813 = vmatmul.f32.gmra.mxu0 %v795
      %v814 = vpop.f32.mrf.mxu0
      %v815 = vadd.f32 0.0, %v814
      %816 = vdwg.mxu0
      %v817 = vmul.f32 %v815, %v815
      %819 = vrot.lane.b32.xlu0 %v817, 1
      %v820 = vpop.permute.xlu0 %819
      %v822 = vsub.f32 %v815, %v820
      %v823 = vmax.f32 %v822, 0.0
      %v824 = vadd.f32 %v823, 1e-05
      %v825 = vrsqrt.pop %v824
      %v826 = vmul.f32 %v825, %v824
      %v827 = vmul.f32 %v826, %v825
      %v828 = vmul.f32 0.5, %v827
      %v829 = vsub.f32 1.5, %v828
      %v830 = vmul.f32 %v825, %v829
      %vm831 = vweird.f32 %v824
      %vm832 = vweird.f32 %v825
      %vm833 = vmor %vm831, %vm832
      %v834 = vsel %vm833, %v825, %v830
      %836 = vrot.lane.b32.xlu0 %v784, 1
      %v837 = vpop.permute.xlu0 %836
      %v839 = vmul.f32 %v834, %v837
      %841 = vrot.lane.b32.xlu0 %v839, 127
      %v842 = vpop.permute.xlu0 %841
      %v844 = vmul.f32 %v815, %v842
      %v845 = vsub.f32 %v785, %v844
      %846 = vset.pattern.permute.xlu0 1
      %847 = vperm.xlu0 %846, %v839
      %v848 = vpop.permute.xlu0 %847
      %v850 = vmul.f32 %v781, %v848
      %852 = vset.pattern.permute.xlu0 0
      %853 = vperm.xlu0 %852, %v845
      %v854 = vpop.permute.xlu0 %853
      %v856 = vadd.f32 %v850, %v854
      %v857 = vmax.f32 %v856, 0.0
      %v858 = vld [vmem:[%s10] sm:$0xff]
      %v859 = vld [vmem:[%s10 + $0x8] sm:$0xff]
      %v860 = vld [vmem:[%s10 + $0x10] sm:$0xff]
      %v861 = vld [vmem:[%s10 + $0x18] sm:$0xff]
      %v862 = vld [vmem:[%s11] sm:$0xff]
      %v863 = vld [vmem:[%s11 + $0x8] sm:$0xff]
      %v864 = vld [vmem:[%s11 + $0x10] sm:$0xff]
      %v865 = vld [vmem:[%s11 + $0x18] sm:$0xff]
      %867 = vset.pattern.permute.xlu0 0
      %868 = vperm.xlu0 %867, %v862
      %v869 = vpop.permute.xlu0 %868
      %872 = vset.pattern.permute.xlu0 0
      %873 = vperm.xlu0 %872, %v863
      %v874 = vpop.permute.xlu0 %873
      %877 = vset.pattern.permute.xlu0 0
      %878 = vperm.xlu0 %877, %v864
      %v879 = vpop.permute.xlu0 %878
      %882 = vset.pattern.permute.xlu0 0
      %883 = vperm.xlu0 %882, %v865
      %v884 = vpop.permute.xlu0 %883
      %v887 = vsel %vm570, %v858, 0
      %v890 = vsel %vm570, %v859, 0
      %v893 = vsel %vm570, %v860, 0
      %v896 = vsel %vm570, %v861, 0
      %898 = vmatpush.msra.mxu0 0.0
      %899 = vmatpush.msra.mxu0 0.0
      %900 = vmatpush.msra.mxu0 0.0
      %901 = vmatpush.msra.mxu0 0.0
      %902 = vmatpush.msra.mxu0 0.0
      %903 = vmatpush.msra.mxu0 0.0
      %904 = vmatpush.msra.mxu0 0.0
      %905 = vmatpush.msra.mxu0 0.0
      %906 = vmatpush.msra.mxu0 0.0
      %907 = vmatpush.msra.mxu0 0.0
      %908 = vmatpush.msra.mxu0 0.0
      %909 = vmatpush.msra.mxu0 0.0
      %910 = vmatpush.msra.mxu0 0.0
      %911 = vmatpush.msra.mxu0 0.0
      %912 = vmatpush.msra.mxu0 0.0
      %913 = vmatpush.msra.mxu0 %v857
      %914 = vmatmul.f32.gmra.mxu0 %v887
      %v915 = vpop.f32.mrf.mxu0
      %v916 = vadd.f32 %v869, %v915
      %917 = vmatmul.f32.gmra.mxu0 %v890
      %v918 = vpop.f32.mrf.mxu0
      %v919 = vadd.f32 %v874, %v918
      %920 = vmatmul.f32.gmra.mxu0 %v893
      %v921 = vpop.f32.mrf.mxu0
      %v922 = vadd.f32 %v879, %v921
      %923 = vmatmul.f32.gmra.mxu0 %v896
      %v924 = vpop.f32.mrf.mxu0
      %v925 = vadd.f32 %v884, %v924
      %926 = vdwg.mxu0
      %v927 = vld [vmem:[%s15] sm:$0xff]
      %v928 = vld [vmem:[%s15 + $0x8] sm:$0xff]
      %v929 = vld [vmem:[%s15 + $0x10] sm:$0xff]
      %v930 = vld [vmem:[%s15 + $0x18] sm:$0xff]
      %v931 = vld [vmem:[%s12] sm:$0xff]
      %v932 = vld [vmem:[%s12 + $0x8] sm:$0xff]
      %v933 = vld [vmem:[%s12 + $0x10] sm:$0xff]
      %v934 = vld [vmem:[%s12 + $0x18] sm:$0xff]
      %v935 = vld [vmem:[%s13] sm:$0xff]
      %v936 = vld [vmem:[%s13 + $0x8] sm:$0xff]
      %v937 = vld [vmem:[%s13 + $0x10] sm:$0xff]
      %v938 = vld [vmem:[%s13 + $0x18] sm:$0xff]
      %v939 = vsel %vm560, %v916, 0.0
      %940 = vadd.xlane.f32.xlu0 %v939
      %v941 = vpop.xlane.xlu0 %940
      %v942 = vsel %vm560, %v919, 0.0
      %943 = vadd.xlane.f32.xlu0 %v942
      %v944 = vpop.xlane.xlu0 %943
      %v945 = vsel %vm560, %v922, 0.0
      %946 = vadd.xlane.f32.xlu0 %v945
      %v947 = vpop.xlane.xlu0 %946
      %v948 = vsel %vm560, %v925, 0.0
      %949 = vadd.xlane.f32.xlu0 %v948
      %v950 = vpop.xlane.xlu0 %949
      %v951 = vmul.f32 %v916, %v916
      %v952 = vmul.f32 %v919, %v919
      %v953 = vmul.f32 %v922, %v922
      %v954 = vmul.f32 %v925, %v925
      %v955 = vsel %vm560, %v951, 0.0
      %956 = vadd.xlane.f32.xlu0 %v955
      %v957 = vpop.xlane.xlu0 %956
      %v958 = vsel %vm560, %v952, 0.0
      %959 = vadd.xlane.f32.xlu0 %v958
      %v960 = vpop.xlane.xlu0 %959
      %v961 = vsel %vm560, %v953, 0.0
      %962 = vadd.xlane.f32.xlu0 %v961
      %v963 = vpop.xlane.xlu0 %962
      %v964 = vsel %vm560, %v954, 0.0
      %965 = vadd.xlane.f32.xlu0 %v964
      %v966 = vpop.xlane.xlu0 %965
      %v967 = vsel %vm568, %v941, %v957
      %v968 = vsel %vm568, %v944, %v960
      %v969 = vsel %vm568, %v947, %v963
      %v970 = vsel %vm568, %v950, %v966
      %v972 = vsel %vm533, %v927, 0
      %v975 = vsel %vm533, %v928, 0
      %v978 = vsel %vm533, %v929, 0
      %v981 = vsel %vm533, %v930, 0
      %983 = vmatpush.msra.mxu0 0.0
      %984 = vmatpush.msra.mxu0 0.0
      %985 = vmatpush.msra.mxu0 0.0
      %986 = vmatpush.msra.mxu0 0.0
      %987 = vmatpush.msra.mxu0 0.0
      %988 = vmatpush.msra.mxu0 0.0
      %989 = vmatpush.msra.mxu0 0.0
      %990 = vmatpush.msra.mxu0 0.0
      %991 = vmatpush.msra.mxu0 0.0
      %992 = vmatpush.msra.mxu0 0.0
      %993 = vmatpush.msra.mxu0 0.0
      %994 = vmatpush.msra.mxu0 0.0
      %995 = vmatpush.msra.mxu0 %v970
      %996 = vmatpush.msra.mxu0 %v969
      %997 = vmatpush.msra.mxu0 %v968
      %998 = vmatpush.msra.mxu0 %v967
      %999 = vmatmul.f32.gmra.mxu0 %v972
      %v1000 = vpop.f32.mrf.mxu0
      %v1001 = vadd.f32 0.0, %v1000
      %1002 = vmatmul.f32.gmra.mxu0 %v975
      %v1003 = vpop.f32.mrf.mxu0
      %v1004 = vadd.f32 0.0, %v1003
      %1005 = vmatmul.f32.gmra.mxu0 %v978
      %v1006 = vpop.f32.mrf.mxu0
      %v1007 = vadd.f32 0.0, %v1006
      %1008 = vmatmul.f32.gmra.mxu0 %v981
      %v1009 = vpop.f32.mrf.mxu0
      %v1010 = vadd.f32 0.0, %v1009
      %1011 = vdwg.mxu0
      %v1012 = vmul.f32 %v1001, %v1001
      %v1013 = vmul.f32 %v1004, %v1004
      %v1014 = vmul.f32 %v1007, %v1007
      %v1015 = vmul.f32 %v1010, %v1010
      %1020 = vrot.lane.b32.xlu0 %v1012, 1
      %v1021 = vpop.permute.xlu0 %1020
      %1022 = vrot.lane.b32.xlu0 %v1013, 1
      %v1023 = vpop.permute.xlu0 %1022
      %1024 = vrot.lane.b32.xlu0 %v1014, 1
      %v1025 = vpop.permute.xlu0 %1024
      %1026 = vrot.lane.b32.xlu0 %v1015, 1
      %v1027 = vpop.permute.xlu0 %1026
      %v1032 = vsub.f32 %v1001, %v1021
      %v1033 = vsub.f32 %v1004, %v1023
      %v1034 = vsub.f32 %v1007, %v1025
      %v1035 = vsub.f32 %v1010, %v1027
      %v1036 = vmax.f32 %v1032, 0.0
      %v1037 = vmax.f32 %v1033, 0.0
      %v1038 = vmax.f32 %v1034, 0.0
      %v1039 = vmax.f32 %v1035, 0.0
      %v1040 = vadd.f32 %v1036, 1e-05
      %v1041 = vadd.f32 %v1037, 1e-05
      %v1042 = vadd.f32 %v1038, 1e-05
      %v1043 = vadd.f32 %v1039, 1e-05
      %v1044 = vrsqrt.pop %v1040
      %v1045 = vmul.f32 %v1044, %v1040
      %v1046 = vmul.f32 %v1045, %v1044
      %v1047 = vmul.f32 0.5, %v1046
      %v1048 = vsub.f32 1.5, %v1047
      %v1049 = vmul.f32 %v1044, %v1048
      %vm1050 = vweird.f32 %v1040
      %vm1051 = vweird.f32 %v1044
      %vm1052 = vmor %vm1050, %vm1051
      %v1053 = vsel %vm1052, %v1044, %v1049
      %v1054 = vrsqrt.pop %v1041
      %v1055 = vmul.f32 %v1054, %v1041
      %v1056 = vmul.f32 %v1055, %v1054
      %v1057 = vmul.f32 0.5, %v1056
      %v1058 = vsub.f32 1.5, %v1057
      %v1059 = vmul.f32 %v1054, %v1058
      %vm1060 = vweird.f32 %v1041
      %vm1061 = vweird.f32 %v1054
      %vm1062 = vmor %vm1060, %vm1061
      %v1063 = vsel %vm1062, %v1054, %v1059
      %v1064 = vrsqrt.pop %v1042
      %v1065 = vmul.f32 %v1064, %v1042
      %v1066 = vmul.f32 %v1065, %v1064
      %v1067 = vmul.f32 0.5, %v1066
      %v1068 = vsub.f32 1.5, %v1067
      %v1069 = vmul.f32 %v1064, %v1068
      %vm1070 = vweird.f32 %v1042
      %vm1071 = vweird.f32 %v1064
      %vm1072 = vmor %vm1070, %vm1071
      %v1073 = vsel %vm1072, %v1064, %v1069
      %v1074 = vrsqrt.pop %v1043
      %v1075 = vmul.f32 %v1074, %v1043
      %v1076 = vmul.f32 %v1075, %v1074
      %v1077 = vmul.f32 0.5, %v1076
      %v1078 = vsub.f32 1.5, %v1077
      %v1079 = vmul.f32 %v1074, %v1078
      %vm1080 = vweird.f32 %v1043
      %vm1081 = vweird.f32 %v1074
      %vm1082 = vmor %vm1080, %vm1081
      %v1083 = vsel %vm1082, %v1074, %v1079
      %1088 = vrot.lane.b32.xlu0 %v931, 1
      %v1089 = vpop.permute.xlu0 %1088
      %1090 = vrot.lane.b32.xlu0 %v932, 1
      %v1091 = vpop.permute.xlu0 %1090
      %1092 = vrot.lane.b32.xlu0 %v933, 1
      %v1093 = vpop.permute.xlu0 %1092
      %1094 = vrot.lane.b32.xlu0 %v934, 1
      %v1095 = vpop.permute.xlu0 %1094
      %v1100 = vmul.f32 %v1053, %v1089
      %v1101 = vmul.f32 %v1063, %v1091
      %v1102 = vmul.f32 %v1073, %v1093
      %v1103 = vmul.f32 %v1083, %v1095
      %1108 = vrot.lane.b32.xlu0 %v1100, 127
      %v1109 = vpop.permute.xlu0 %1108
      %1110 = vrot.lane.b32.xlu0 %v1101, 127
      %v1111 = vpop.permute.xlu0 %1110
      %1112 = vrot.lane.b32.xlu0 %v1102, 127
      %v1113 = vpop.permute.xlu0 %1112
      %1114 = vrot.lane.b32.xlu0 %v1103, 127
      %v1115 = vpop.permute.xlu0 %1114
      %v1120 = vmul.f32 %v1001, %v1109
      %v1121 = vmul.f32 %v1004, %v1111
      %v1122 = vmul.f32 %v1007, %v1113
      %v1123 = vmul.f32 %v1010, %v1115
      %v1124 = vsub.f32 %v935, %v1120
      %v1125 = vsub.f32 %v936, %v1121
      %v1126 = vsub.f32 %v937, %v1122
      %v1127 = vsub.f32 %v938, %v1123
      %1128 = vset.pattern.permute.xlu0 1
      %1129 = vperm.xlu0 %1128, %v1100
      %v1130 = vpop.permute.xlu0 %1129
      %1132 = vset.pattern.permute.xlu0 1
      %1133 = vperm.xlu0 %1132, %v1101
      %v1134 = vpop.permute.xlu0 %1133
      %1136 = vset.pattern.permute.xlu0 1
      %1137 = vperm.xlu0 %1136, %v1102
      %v1138 = vpop.permute.xlu0 %1137
      %1140 = vset.pattern.permute.xlu0 1
      %1141 = vperm.xlu0 %1140, %v1103
      %v1142 = vpop.permute.xlu0 %1141
      %v1144 = vmul.f32 %v916, %v1130
      %v1145 = vmul.f32 %v919, %v1134
      %v1146 = vmul.f32 %v922, %v1138
      %v1147 = vmul.f32 %v925, %v1142
      %1149 = vset.pattern.permute.xlu0 0
      %1150 = vperm.xlu0 %1149, %v1124
      %v1151 = vpop.permute.xlu0 %1150
      %1154 = vset.pattern.permute.xlu0 0
      %1155 = vperm.xlu0 %1154, %v1125
      %v1156 = vpop.permute.xlu0 %1155
      %1159 = vset.pattern.permute.xlu0 0
      %1160 = vperm.xlu0 %1159, %v1126
      %v1161 = vpop.permute.xlu0 %1160
      %1164 = vset.pattern.permute.xlu0 0
      %1165 = vperm.xlu0 %1164, %v1127
      %v1166 = vpop.permute.xlu0 %1165
      %v1168 = vadd.f32 %v1144, %v1151
      %v1169 = vadd.f32 %v1145, %v1156
      %v1170 = vadd.f32 %v1146, %v1161
      %v1171 = vadd.f32 %v1147, %v1166
      %v1172 = vmax.f32 %v1168, 0.0
      %v1173 = vmax.f32 %v1169, 0.0
      %v1174 = vmax.f32 %v1170, 0.0
      %v1175 = vmax.f32 %v1171, 0.0
      %v1176 = vadd.f32 %v522, %v1172
      %v1177 = vadd.f32 %v523, %v1173
      %v1178 = vadd.f32 %v524, %v1174
      %v1179 = vadd.f32 %v525, %v1175
      %v1180 = vmax.f32 %v1176, 0.0
      %v1181 = vmax.f32 %v1177, 0.0
      %v1182 = vmax.f32 %v1178, 0.0
      %v1183 = vmax.f32 %v1179, 0.0
      %1184 = vst.msk [vmem:[%s521] sm:$0xff] %vm560, %v1180
      %1185 = vst.msk [vmem:[%s521 + $0x8] sm:$0xff] %vm560, %v1181
      %1186 = vst.msk [vmem:[%s521 + $0x10] sm:$0xff] %vm560, %v1182
      %1187 = vst.msk [vmem:[%s521 + $0x18] sm:$0xff] %vm560, %v1183
      %p1188 = scmp.lt.s32.totalorder %s27, 1
      %s1189 = scalar_select %p1188, %s27, 1
      %s1190 = smul.addr %s1189, 4
      %s1191 = smul.addr %s1190, 8
      %s1192 = scalar_lea.vmem %s16, %s1191
      // Predicated region
      $region85: #{bottleneck_forward.1} parent=83 // pred_check
        %p1193 = pneg %p386
      $region86: #{bottleneck_forward.1} parent=83 // pred_check_branch
        %1195 = sbr.rel (%p1193) target = $region88
      $region87: #{bottleneck_forward.1} parent=83 // pred_region
        _
      $region88: #{bottleneck_forward.1} parent=83 // pred_fallthru
        _
    $region84: #{bottleneck_forward.1} parent=5 // pred_fallthru
      _
    %p1196 = scmp.le.s32.totalorder 2, %s22
    // Predicated region
    $region89: #{bottleneck_forward.1} parent=5 // pred_check
      %p1197 = pneg %p1196
    $region90: #{bottleneck_forward.1} parent=5 // pred_check_branch
      %1199 = sbr.rel (%p1197) target = $region92
    $region91: #{bottleneck_forward.1} parent=5 // pred_region
      %s1200 = ssub.s32 %s22, 2
      // Predicated region
      $region93: #{bottleneck_forward.1} parent=91 // pred_check
        %p1201 = pneg %p392
      $region94: #{bottleneck_forward.1} parent=91 // pred_check_branch
        %1203 = sbr.rel (%p1201) target = $region96
      $region95: #{bottleneck_forward.1} parent=91 // pred_region
        %p1204 = scmp.lt.s32.totalorder %s28, 1
        %s1205 = scalar_select %p1204, %s28, 1
        %s1206 = smul.addr %s1205, 4
        %s1207 = smul.addr %s1206, 8
        %s1208 = scalar_lea.vmem %s16, %s1207
      $region96: #{bottleneck_forward.1} parent=91 // pred_fallthru
        _
    $region92: #{bottleneck_forward.1} parent=5 // pred_fallthru
      _
  $region6: #{bottleneck_forward.1} parent=0 // loop_footer
    %s26 = sadd.s32 1, %s22
  $region7: #{bottleneck_forward.1} parent=0 // loop_footer_branch
    %21 = sbr.rel target = $region3
  $region8: #{bottleneck_forward.1} parent=0 // loop_exit
    _

</llo_original>
